<compile_context>
chip_gen: v6e
topology: v6e:2x2x1
jax: 0.10.0
libtpu: 0.0.40
codegen_flags: <defaults>
</compile_context>

<pallas_src>
import numpy as np
import jax
import jax.numpy as jnp
from jax import lax
from jax.experimental import pallas as pl
from jax.experimental.pallas import tpu as pltpu

KERNELS = (7, 7, 7)
DILATIONS = (1, 3, 9)
_LANE = 128


def _round_up(n, m):
    return (n + m - 1) // m * m


def _shift_fwd(v, s):
    """r[..., i] = v[..., i + s] (cyclic roll; callers keep reads clear of wrap)."""
    if s == 0:
        return v
    W = v.shape[-1]
    return pltpu.roll(v, (-s) % W, axis=len(v.shape) - 1)


def _sliding_reduce(xp, d, op):
    """F[..., i] = op(xp[i], ..., xp[i + d - 1]) via a log-depth doubling tree."""
    if d == 1:
        return xp
    pows = [xp]                      # pows[j][i] = op over xp[i .. i + 2^j - 1]
    w = 1
    while 2 * w <= d:
        prev = pows[-1]
        pows.append(op(prev, _shift_fwd(prev, w)))
        w *= 2
    acc, covered, rem = None, 0, d
    for j in range(len(pows) - 1, -1, -1):
        w = 1 << j
        if rem >= w:
            piece = _shift_fwd(pows[j], covered)
            acc = piece if acc is None else op(acc, piece)
            covered += w
            rem -= w
    return acc


def _make_kernel(kernels, dilations, cdims, T, t_blk, halo, w_width, rows):
    n = len(kernels)

    def kernel(*refs):
        x_ref = refs[0]                          # VMEM (R, Tp) f32 (zero pre-padded)
        w_refs = refs[1:1 + n]                   # SMEM flat (C*K,) f32
        b_refs = refs[1 + n:1 + 2 * n]           # SMEM (C,)     f32
        o_ref = refs[1 + 2 * n]                  # VMEM (R, Ctot, T_BLK)

        j = pl.program_id(1)
        start = pl.multiple_of(j * t_blk, _LANE)
        xs = x_ref[:, pl.ds(start, w_width)]     # haloed slab (R, W)

        # Global time index of each slab lane -> where the slab hangs over the
        # [0, T) edges apply the module's boundary padding (-inf / 0) via select.
        gpos = lax.broadcasted_iota(jnp.int32, (rows, w_width), 1) + (start - halo)
        valid = (gpos >= 0) & (gpos < T)

        c_off = 0
        for br in range(n):
            K, d, C = kernels[br], dilations[br], cdims[br]
            w_ref, b_ref = w_refs[br], b_refs[br]
            P = (K - 1) * d // 2

            # --- MaxPool1d(d,1,d//2) -> AvgPool1d(d,1,d//2)  (odd d, stride 1) ---
            if d > 1:
                p = d // 2
                xneg = jnp.where(valid, xs, -jnp.inf)
                m = _shift_fwd(_sliding_reduce(xneg, d, jnp.maximum), -p)
                m = jnp.where(valid, m, 0.0)          # count_include_pad=True
                a = _shift_fwd(_sliding_reduce(m, d, jnp.add), -p) * (1.0 / d)
                a = jnp.where(valid, a, 0.0)
            else:
                a = xs        # wrapper zero-pad already gives 0 outside [0, T)

            # --- Conv1d(1 -> C, K, dilation=d, padding=P) as VPU broadcast-FMA ---
            # taps outer / channels inner: only C accumulators of width T_BLK live.
            accs = [jnp.full((rows, t_blk), b_ref[c], jnp.float32) for c in range(C)]
            for k in range(K):
                # tap_k[t] = a[t + k*d - P]  (a already zero outside [0, T))
                tap = _shift_fwd(a, halo - P + k * d)[:, :t_blk]
                for c in range(C):
                    accs[c] = accs[c] + tap * w_ref[c * K + k]

            # One lane-dense store per branch (contiguous channel slice) instead of
            # per-channel sublane-masked stores.
            blk = jnp.concatenate([acc[:, None, :] for acc in accs], axis=1)
            o_ref[:, c_off:c_off + C, :] = blk.astype(o_ref.dtype)
            c_off += C

    return kernel


def trend_conv(x, params, kernels=KERNELS, dilations=DILATIONS, t_blk=512,
               out_dtype=jnp.float32):
    """x: (B, 1, T) NCT; returns (B, output_dim, T), matching the PyTorch module."""
    assert dilations[0] == 1
    assert all(d % 2 == 1 for d in dilations), "even dilation changes output length"
    assert all(((k - 1) * d) % 2 == 0 for k, d in zip(kernels, dilations))

    xb = x[:, 0, :].astype(jnp.float32)
    B, T = xb.shape
    cdims = [w.shape[0] for (w, _) in params]
    Ctot = sum(cdims)

    # Batch rows per grid step: sublane-dense (8) when possible; rows are
    # independent, and for B % R != 0 the extra rows of the last input block hold
    # stale VMEM (harmless: out-of-range output rows are masked by Pallas).
    R = 8 if B >= 8 else B

    # Time block (lane) size.  T_BLK <= ~512-2048 keeps vreg/VMEM pressure bounded
    # on all generations (v7x has only 64 MiB physical VMEM).
    T_BLK = min(_round_up(max(t_blk, _LANE), _LANE), _round_up(T, _LANE))
    if pl.cdiv(B, R) * pl.cdiv(T, T_BLK) < 2 and T > _LANE:
        # Give the grid >=2 parallel points so v7x's second TensorCore has work.
        T_BLK = _round_up(-(-T // 2), _LANE)
    n_tb = pl.cdiv(T, T_BLK)
    T_ceil = n_tb * T_BLK

    # Halo: maxpool (d-1 over two shifts) + conv reach (K-1)*d//2, rounded so the
    # slab width stays a multiple of 128 lanes.
    halo = _round_up(max((k - 1) * d // 2 + (d - 1)
                         for k, d in zip(kernels, dilations)), 64)
    W = T_BLK + 2 * halo
    Tp = T_ceil + 2 * halo
    x_padded = jnp.pad(xb, ((0, 0), (halo, Tp - halo - T)))   # zeros outside [0, T)

    kernel = _make_kernel(tuple(kernels), tuple(dilations), tuple(cdims),
                          T, T_BLK, halo, W, R)

    smem_spec = pl.BlockSpec(memory_space=pltpu.MemorySpace.SMEM)
    in_specs = [pl.BlockSpec((R, Tp), lambda i, j: (i, 0))]   # whole padded row
    args = [x_padded]
    for (w, _) in params:                     # weights: flat 1-D SMEM scalars
        in_specs.append(smem_spec)
        args.append(w.reshape(-1).astype(jnp.float32))
    for (_, b) in params:                     # biases: 1-D SMEM scalars
        in_specs.append(smem_spec)
        args.append(b.reshape(-1).astype(jnp.float32))

    return pl.pallas_call(
        kernel,
        out_shape=jax.ShapeDtypeStruct((B, Ctot, T), out_dtype),
        grid=(pl.cdiv(B, R), n_tb),
        in_specs=in_specs,
        out_specs=pl.BlockSpec((R, Ctot, T_BLK), lambda i, j: (i, 0, j)),
        compiler_params=pltpu.CompilerParams(
            dimension_semantics=("parallel", "parallel"),
            vmem_limit_bytes=32 * 1024 * 1024),
    )(*args)


def trend_conv_ref(x, params, kernels=KERNELS, dilations=DILATIONS):
    """Pure-JAX reference (lax.reduce_window + lax.conv_general_dilated)."""
    xb = x[:, 0, :]
    outs = []
    for (w, b), K, d in zip(params, kernels, dilations):
        a = xb
        if d > 1:
            a = lax.reduce_window(a, -jnp.inf, lax.max, (1, d), (1, 1),
                                  [(0, 0), (d // 2, d // 2)])
            a = lax.reduce_window(a, 0.0, lax.add, (1, d), (1, 1),
                                  [(0, 0), (d // 2, d // 2)]) / d
        P = (K - 1) * d // 2
        out = lax.conv_general_dilated(
            a[:, None, :], w[:, None, :], window_strides=(1,),
            padding=[(P, P)], rhs_dilation=(d,),
            dimension_numbers=("NCH", "OIH", "NCH"),
            precision=lax.Precision.HIGHEST)
        outs.append(out + b[None, :, :])
    return jnp.concatenate(outs, axis=1)


def init_params(key, output_dim, kernels=KERNELS, dilations=DILATIONS):
    # Same channel split as the PyTorch __init__.
    n = len(dilations)
    target_dims = [output_dim // n - i for i in range(n)]
    target_dims[0] += output_dim - sum(target_dims)
    # TODO(synk): `Conv1d` in the source repo may be a custom wrapper; standard
    # nn.Conv1d semantics (cross-correlation + bias) are assumed here.
    params = []
    for i, (C, K) in enumerate(zip(target_dims, kernels)):
        kw, kb = jax.random.split(jax.random.fold_in(key, i))
        bound = 1.0 / float(K) ** 0.5  # fan_in = in_channels(1) * K
        w = jax.random.uniform(kw, (C, K), jnp.float32, -bound, bound)
        b = jax.random.uniform(kb, (C, 1), jnp.float32, -bound, bound)
        params.append((w, b))
    return params, target_dims


if __name__ == "__main__":
    key = jax.random.PRNGKey(0)
    output_dim = 16
    cases = (
        dict(B=2, T=128, t_blk=512),   # R == B < 8, single grid point
        dict(B=8, T=256, t_blk=128),   # sublane-dense R=8, 2 time blocks (edge masks)
        dict(B=5, T=384, t_blk=128),   # R == B, 3 time blocks incl. interior block
    )
    for idx, cs in enumerate(cases):
        B, T, tb = cs["B"], cs["T"], cs["t_blk"]
        kx, kp = jax.random.split(jax.random.fold_in(key, idx))
        x = jax.random.normal(kx, (B, 1, T), dtype=jnp.float32)
        params, target_dims = init_params(kp, output_dim)

        out = jax.block_until_ready(trend_conv(x, params, t_blk=tb))
        assert out.shape == (B, output_dim, T), out.shape

        ref = jax.block_until_ready(trend_conv_ref(x, params))
        np.testing.assert_allclose(np.asarray(out), np.asarray(ref),
                                   atol=1e-4, rtol=1e-4)
    print("KERNEL_OK")
</pallas_src>

<mosaic_0001>
module attributes {stable_mosaic.version = 11 : i64} {
  func.func @kernel(%arg0: i32, %arg1: i32, %arg2: memref<2x256xf32, #tpu.memory_space<vmem>>, %arg3: memref<63xf32, #tpu.memory_space<smem>>, %arg4: memref<28xf32, #tpu.memory_space<smem>>, %arg5: memref<21xf32, #tpu.memory_space<smem>>, %arg6: memref<9xf32, #tpu.memory_space<smem>>, %arg7: memref<4xf32, #tpu.memory_space<smem>>, %arg8: memref<3xf32, #tpu.memory_space<smem>>, %arg9: memref<2x16x128xf32, #tpu.memory_space<vmem>>) attributes {dimension_semantics = [#tpu.dimension_semantics<parallel>, #tpu.dimension_semantics<parallel>], iteration_bounds = array<i64: 1, 1>, scalar_prefetch = 0 : i64, scratch_operands = 0 : i64, tpu.core_type = #tpu.core_type<tc>, window_params = [{transform_indices = @transform_0, window_bounds = array<i64: 2, 256>}, {transform_indices = @transform_1, window_bounds = array<i64: 63>}, {transform_indices = @transform_2, window_bounds = array<i64: 28>}, {transform_indices = @transform_3, window_bounds = array<i64: 21>}, {transform_indices = @transform_4, window_bounds = array<i64: 9>}, {transform_indices = @transform_5, window_bounds = array<i64: 4>}, {transform_indices = @transform_6, window_bounds = array<i64: 3>}, {transform_indices = @transform_7, window_bounds = array<i64: 2, 16, 128>}]} {
    %c128_i32 = arith.constant 128 : i32
    %0 = arith.muli %arg1, %c128_i32 : i32
    %1 = tpu.assume_multiple %0, 128 : i32
    %c0 = arith.constant 0 : index
    %2 = arith.index_cast %1 : i32 to index
    %3 = vector.load %arg2[%c0, %2] : memref<2x256xf32, #tpu.memory_space<vmem>>, vector<2x256xf32>
    %4 = tpu.iota {dimensions = array<i32: 1>} : vector<2x256xi32>
    %c64_i32 = arith.constant 64 : i32
    %5 = arith.subi %1, %c64_i32 : i32
    %6 = vector.broadcast %5 : i32 to vector<2x256xi32>
    %7 = arith.addi %4, %6 : vector<2x256xi32>
    %c0_i32 = arith.constant 0 : i32
    %8 = vector.broadcast %c0_i32 : i32 to vector<2x256xi32>
    %9 = arith.cmpi sge, %7, %8 : vector<2x256xi32>
    %c128_i32_0 = arith.constant 128 : i32
    %10 = vector.broadcast %c128_i32_0 : i32 to vector<2x256xi32>
    %11 = arith.cmpi slt, %7, %10 : vector<2x256xi32>
    %12 = arith.andi %9, %11 : vector<2x256xi1>
    %c0_1 = arith.constant 0 : index
    %13 = memref.load %arg6[%c0_1] : memref<9xf32, #tpu.memory_space<smem>>
    %14 = vector.broadcast %13 : f32 to vector<2x128xf32>
    %c1 = arith.constant 1 : index
    %15 = memref.load %arg6[%c1] : memref<9xf32, #tpu.memory_space<smem>>
    %16 = vector.broadcast %15 : f32 to vector<2x128xf32>
    %c2 = arith.constant 2 : index
    %17 = memref.load %arg6[%c2] : memref<9xf32, #tpu.memory_space<smem>>
    %18 = vector.broadcast %17 : f32 to vector<2x128xf32>
    %c3 = arith.constant 3 : index
    %19 = memref.load %arg6[%c3] : memref<9xf32, #tpu.memory_space<smem>>
    %20 = vector.broadcast %19 : f32 to vector<2x128xf32>
    %c4 = arith.constant 4 : index
    %21 = memref.load %arg6[%c4] : memref<9xf32, #tpu.memory_space<smem>>
    %22 = vector.broadcast %21 : f32 to vector<2x128xf32>
    %c5 = arith.constant 5 : index
    %23 = memref.load %arg6[%c5] : memref<9xf32, #tpu.memory_space<smem>>
    %24 = vector.broadcast %23 : f32 to vector<2x128xf32>
    %c6 = arith.constant 6 : index
    %25 = memref.load %arg6[%c6] : memref<9xf32, #tpu.memory_space<smem>>
    %26 = vector.broadcast %25 : f32 to vector<2x128xf32>
    %c7 = arith.constant 7 : index
    %27 = memref.load %arg6[%c7] : memref<9xf32, #tpu.memory_space<smem>>
    %28 = vector.broadcast %27 : f32 to vector<2x128xf32>
    %c8 = arith.constant 8 : index
    %29 = memref.load %arg6[%c8] : memref<9xf32, #tpu.memory_space<smem>>
    %30 = vector.broadcast %29 : f32 to vector<2x128xf32>
    %c195_i32 = arith.constant 195 : i32
    %31 = tpu.dynamic_rotate %3 by %c195_i32 dim 1 : vector<2x256xf32>, i32 -> vector<2x256xf32>
    %32 = vector.extract_strided_slice %31 {offsets = [0, 0], sizes = [2, 128], strides = [1, 1]} : vector<2x256xf32> to vector<2x128xf32>
    %c0_2 = arith.constant 0 : index
    %33 = memref.load %arg3[%c0_2] : memref<63xf32, #tpu.memory_space<smem>>
    %34 = vector.broadcast %33 : f32 to vector<2x128xf32>
    %35 = arith.mulf %32, %34 : vector<2x128xf32>
    %36 = arith.addf %14, %35 : vector<2x128xf32>
    %c7_3 = arith.constant 7 : index
    %37 = memref.load %arg3[%c7_3] : memref<63xf32, #tpu.memory_space<smem>>
    %38 = vector.broadcast %37 : f32 to vector<2x128xf32>
    %39 = arith.mulf %32, %38 : vector<2x128xf32>
    %40 = arith.addf %16, %39 : vector<2x128xf32>
    %c14 = arith.constant 14 : index
    %41 = memref.load %arg3[%c14] : memref<63xf32, #tpu.memory_space<smem>>
    %42 = vector.broadcast %41 : f32 to vector<2x128xf32>
    %43 = arith.mulf %32, %42 : vector<2x128xf32>
    %44 = arith.addf %18, %43 : vector<2x128xf32>
    %c21 = arith.constant 21 : index
    %45 = memref.load %arg3[%c21] : memref<63xf32, #tpu.memory_space<smem>>
    %46 = vector.broadcast %45 : f32 to vector<2x128xf32>
    %47 = arith.mulf %32, %46 : vector<2x128xf32>
    %48 = arith.addf %20, %47 : vector<2x128xf32>
    %c28 = arith.constant 28 : index
    %49 = memref.load %arg3[%c28] : memref<63xf32, #tpu.memory_space<smem>>
    %50 = vector.broadcast %49 : f32 to vector<2x128xf32>
    %51 = arith.mulf %32, %50 : vector<2x128xf32>
    %52 = arith.addf %22, %51 : vector<2x128xf32>
    %c35 = arith.constant 35 : index
    %53 = memref.load %arg3[%c35] : memref<63xf32, #tpu.memory_space<smem>>
    %54 = vector.broadcast %53 : f32 to vector<2x128xf32>
    %55 = arith.mulf %32, %54 : vector<2x128xf32>
    %56 = arith.addf %24, %55 : vector<2x128xf32>
    %c42 = arith.constant 42 : index
    %57 = memref.load %arg3[%c42] : memref<63xf32, #tpu.memory_space<smem>>
    %58 = vector.broadcast %57 : f32 to vector<2x128xf32>
    %59 = arith.mulf %32, %58 : vector<2x128xf32>
    %60 = arith.addf %26, %59 : vector<2x128xf32>
    %c49 = arith.constant 49 : index
    %61 = memref.load %arg3[%c49] : memref<63xf32, #tpu.memory_space<smem>>
    %62 = vector.broadcast %61 : f32 to vector<2x128xf32>
    %63 = arith.mulf %32, %62 : vector<2x128xf32>
    %64 = arith.addf %28, %63 : vector<2x128xf32>
    %c56 = arith.constant 56 : index
    %65 = memref.load %arg3[%c56] : memref<63xf32, #tpu.memory_space<smem>>
    %66 = vector.broadcast %65 : f32 to vector<2x128xf32>
    %67 = arith.mulf %32, %66 : vector<2x128xf32>
    %68 = arith.addf %30, %67 : vector<2x128xf32>
    %c194_i32 = arith.constant 194 : i32
    %69 = tpu.dynamic_rotate %3 by %c194_i32 dim 1 : vector<2x256xf32>, i32 -> vector<2x256xf32>
    %70 = vector.extract_strided_slice %69 {offsets = [0, 0], sizes = [2, 128], strides = [1, 1]} : vector<2x256xf32> to vector<2x128xf32>
    %c1_4 = arith.constant 1 : index
    %71 = memref.load %arg3[%c1_4] : memref<63xf32, #tpu.memory_space<smem>>
    %72 = vector.broadcast %71 : f32 to vector<2x128xf32>
    %73 = arith.mulf %70, %72 : vector<2x128xf32>
    %74 = arith.addf %36, %73 : vector<2x128xf32>
    %c8_5 = arith.constant 8 : index
    %75 = memref.load %arg3[%c8_5] : memref<63xf32, #tpu.memory_space<smem>>
    %76 = vector.broadcast %75 : f32 to vector<2x128xf32>
    %77 = arith.mulf %70, %76 : vector<2x128xf32>
    %78 = arith.addf %40, %77 : vector<2x128xf32>
    %c15 = arith.constant 15 : index
    %79 = memref.load %arg3[%c15] : memref<63xf32, #tpu.memory_space<smem>>
    %80 = vector.broadcast %79 : f32 to vector<2x128xf32>
    %81 = arith.mulf %70, %80 : vector<2x128xf32>
    %82 = arith.addf %44, %81 : vector<2x128xf32>
    %c22 = arith.constant 22 : index
    %83 = memref.load %arg3[%c22] : memref<63xf32, #tpu.memory_space<smem>>
    %84 = vector.broadcast %83 : f32 to vector<2x128xf32>
    %85 = arith.mulf %70, %84 : vector<2x128xf32>
    %86 = arith.addf %48, %85 : vector<2x128xf32>
    %c29 = arith.constant 29 : index
    %87 = memref.load %arg3[%c29] : memref<63xf32, #tpu.memory_space<smem>>
    %88 = vector.broadcast %87 : f32 to vector<2x128xf32>
    %89 = arith.mulf %70, %88 : vector<2x128xf32>
    %90 = arith.addf %52, %89 : vector<2x128xf32>
    %c36 = arith.constant 36 : index
    %91 = memref.load %arg3[%c36] : memref<63xf32, #tpu.memory_space<smem>>
    %92 = vector.broadcast %91 : f32 to vector<2x128xf32>
    %93 = arith.mulf %70, %92 : vector<2x128xf32>
    %94 = arith.addf %56, %93 : vector<2x128xf32>
    %c43 = arith.constant 43 : index
    %95 = memref.load %arg3[%c43] : memref<63xf32, #tpu.memory_space<smem>>
    %96 = vector.broadcast %95 : f32 to vector<2x128xf32>
    %97 = arith.mulf %70, %96 : vector<2x128xf32>
    %98 = arith.addf %60, %97 : vector<2x128xf32>
    %c50 = arith.constant 50 : index
    %99 = memref.load %arg3[%c50] : memref<63xf32, #tpu.memory_space<smem>>
    %100 = vector.broadcast %99 : f32 to vector<2x128xf32>
    %101 = arith.mulf %70, %100 : vector<2x128xf32>
    %102 = arith.addf %64, %101 : vector<2x128xf32>
    %c57 = arith.constant 57 : index
    %103 = memref.load %arg3[%c57] : memref<63xf32, #tpu.memory_space<smem>>
    %104 = vector.broadcast %103 : f32 to vector<2x128xf32>
    %105 = arith.mulf %70, %104 : vector<2x128xf32>
    %106 = arith.addf %68, %105 : vector<2x128xf32>
    %c193_i32 = arith.constant 193 : i32
    %107 = tpu.dynamic_rotate %3 by %c193_i32 dim 1 : vector<2x256xf32>, i32 -> vector<2x256xf32>
    %108 = vector.extract_strided_slice %107 {offsets = [0, 0], sizes = [2, 128], strides = [1, 1]} : vector<2x256xf32> to vector<2x128xf32>
    %c2_6 = arith.constant 2 : index
    %109 = memref.load %arg3[%c2_6] : memref<63xf32, #tpu.memory_space<smem>>
    %110 = vector.broadcast %109 : f32 to vector<2x128xf32>
    %111 = arith.mulf %108, %110 : vector<2x128xf32>
    %112 = arith.addf %74, %111 : vector<2x128xf32>
    %c9 = arith.constant 9 : index
    %113 = memref.load %arg3[%c9] : memref<63xf32, #tpu.memory_space<smem>>
    %114 = vector.broadcast %113 : f32 to vector<2x128xf32>
    %115 = arith.mulf %108, %114 : vector<2x128xf32>
    %116 = arith.addf %78, %115 : vector<2x128xf32>
    %c16 = arith.constant 16 : index
    %117 = memref.load %arg3[%c16] : memref<63xf32, #tpu.memory_space<smem>>
    %118 = vector.broadcast %117 : f32 to vector<2x128xf32>
    %119 = arith.mulf %108, %118 : vector<2x128xf32>
    %120 = arith.addf %82, %119 : vector<2x128xf32>
    %c23 = arith.constant 23 : index
    %121 = memref.load %arg3[%c23] : memref<63xf32, #tpu.memory_space<smem>>
    %122 = vector.broadcast %121 : f32 to vector<2x128xf32>
    %123 = arith.mulf %108, %122 : vector<2x128xf32>
    %124 = arith.addf %86, %123 : vector<2x128xf32>
    %c30 = arith.constant 30 : index
    %125 = memref.load %arg3[%c30] : memref<63xf32, #tpu.memory_space<smem>>
    %126 = vector.broadcast %125 : f32 to vector<2x128xf32>
    %127 = arith.mulf %108, %126 : vector<2x128xf32>
    %128 = arith.addf %90, %127 : vector<2x128xf32>
    %c37 = arith.constant 37 : index
    %129 = memref.load %arg3[%c37] : memref<63xf32, #tpu.memory_space<smem>>
    %130 = vector.broadcast %129 : f32 to vector<2x128xf32>
    %131 = arith.mulf %108, %130 : vector<2x128xf32>
    %132 = arith.addf %94, %131 : vector<2x128xf32>
    %c44 = arith.constant 44 : index
    %133 = memref.load %arg3[%c44] : memref<63xf32, #tpu.memory_space<smem>>
    %134 = vector.broadcast %133 : f32 to vector<2x128xf32>
    %135 = arith.mulf %108, %134 : vector<2x128xf32>
    %136 = arith.addf %98, %135 : vector<2x128xf32>
    %c51 = arith.constant 51 : index
    %137 = memref.load %arg3[%c51] : memref<63xf32, #tpu.memory_space<smem>>
    %138 = vector.broadcast %137 : f32 to vector<2x128xf32>
    %139 = arith.mulf %108, %138 : vector<2x128xf32>
    %140 = arith.addf %102, %139 : vector<2x128xf32>
    %c58 = arith.constant 58 : index
    %141 = memref.load %arg3[%c58] : memref<63xf32, #tpu.memory_space<smem>>
    %142 = vector.broadcast %141 : f32 to vector<2x128xf32>
    %143 = arith.mulf %108, %142 : vector<2x128xf32>
    %144 = arith.addf %106, %143 : vector<2x128xf32>
    %c192_i32 = arith.constant 192 : i32
    %145 = tpu.dynamic_rotate %3 by %c192_i32 dim 1 : vector<2x256xf32>, i32 -> vector<2x256xf32>
    %146 = vector.extract_strided_slice %145 {offsets = [0, 0], sizes = [2, 128], strides = [1, 1]} : vector<2x256xf32> to vector<2x128xf32>
    %c3_7 = arith.constant 3 : index
    %147 = memref.load %arg3[%c3_7] : memref<63xf32, #tpu.memory_space<smem>>
    %148 = vector.broadcast %147 : f32 to vector<2x128xf32>
    %149 = arith.mulf %146, %148 : vector<2x128xf32>
    %150 = arith.addf %112, %149 : vector<2x128xf32>
    %c10 = arith.constant 10 : index
    %151 = memref.load %arg3[%c10] : memref<63xf32, #tpu.memory_space<smem>>
    %152 = vector.broadcast %151 : f32 to vector<2x128xf32>
    %153 = arith.mulf %146, %152 : vector<2x128xf32>
    %154 = arith.addf %116, %153 : vector<2x128xf32>
    %c17 = arith.constant 17 : index
    %155 = memref.load %arg3[%c17] : memref<63xf32, #tpu.memory_space<smem>>
    %156 = vector.broadcast %155 : f32 to vector<2x128xf32>
    %157 = arith.mulf %146, %156 : vector<2x128xf32>
    %158 = arith.addf %120, %157 : vector<2x128xf32>
    %c24 = arith.constant 24 : index
    %159 = memref.load %arg3[%c24] : memref<63xf32, #tpu.memory_space<smem>>
    %160 = vector.broadcast %159 : f32 to vector<2x128xf32>
    %161 = arith.mulf %146, %160 : vector<2x128xf32>
    %162 = arith.addf %124, %161 : vector<2x128xf32>
    %c31 = arith.constant 31 : index
    %163 = memref.load %arg3[%c31] : memref<63xf32, #tpu.memory_space<smem>>
    %164 = vector.broadcast %163 : f32 to vector<2x128xf32>
    %165 = arith.mulf %146, %164 : vector<2x128xf32>
    %166 = arith.addf %128, %165 : vector<2x128xf32>
    %c38 = arith.constant 38 : index
    %167 = memref.load %arg3[%c38] : memref<63xf32, #tpu.memory_space<smem>>
    %168 = vector.broadcast %167 : f32 to vector<2x128xf32>
    %169 = arith.mulf %146, %168 : vector<2x128xf32>
    %170 = arith.addf %132, %169 : vector<2x128xf32>
    %c45 = arith.constant 45 : index
    %171 = memref.load %arg3[%c45] : memref<63xf32, #tpu.memory_space<smem>>
    %172 = vector.broadcast %171 : f32 to vector<2x128xf32>
    %173 = arith.mulf %146, %172 : vector<2x128xf32>
    %174 = arith.addf %136, %173 : vector<2x128xf32>
    %c52 = arith.constant 52 : index
    %175 = memref.load %arg3[%c52] : memref<63xf32, #tpu.memory_space<smem>>
    %176 = vector.broadcast %175 : f32 to vector<2x128xf32>
    %177 = arith.mulf %146, %176 : vector<2x128xf32>
    %178 = arith.addf %140, %177 : vector<2x128xf32>
    %c59 = arith.constant 59 : index
    %179 = memref.load %arg3[%c59] : memref<63xf32, #tpu.memory_space<smem>>
    %180 = vector.broadcast %179 : f32 to vector<2x128xf32>
    %181 = arith.mulf %146, %180 : vector<2x128xf32>
    %182 = arith.addf %144, %181 : vector<2x128xf32>
    %c191_i32 = arith.constant 191 : i32
    %183 = tpu.dynamic_rotate %3 by %c191_i32 dim 1 : vector<2x256xf32>, i32 -> vector<2x256xf32>
    %184 = vector.extract_strided_slice %183 {offsets = [0, 0], sizes = [2, 128], strides = [1, 1]} : vector<2x256xf32> to vector<2x128xf32>
    %c4_8 = arith.constant 4 : index
    %185 = memref.load %arg3[%c4_8] : memref<63xf32, #tpu.memory_space<smem>>
    %186 = vector.broadcast %185 : f32 to vector<2x128xf32>
    %187 = arith.mulf %184, %186 : vector<2x128xf32>
    %188 = arith.addf %150, %187 : vector<2x128xf32>
    %c11 = arith.constant 11 : index
    %189 = memref.load %arg3[%c11] : memref<63xf32, #tpu.memory_space<smem>>
    %190 = vector.broadcast %189 : f32 to vector<2x128xf32>
    %191 = arith.mulf %184, %190 : vector<2x128xf32>
    %192 = arith.addf %154, %191 : vector<2x128xf32>
    %c18 = arith.constant 18 : index
    %193 = memref.load %arg3[%c18] : memref<63xf32, #tpu.memory_space<smem>>
    %194 = vector.broadcast %193 : f32 to vector<2x128xf32>
    %195 = arith.mulf %184, %194 : vector<2x128xf32>
    %196 = arith.addf %158, %195 : vector<2x128xf32>
    %c25 = arith.constant 25 : index
    %197 = memref.load %arg3[%c25] : memref<63xf32, #tpu.memory_space<smem>>
    %198 = vector.broadcast %197 : f32 to vector<2x128xf32>
    %199 = arith.mulf %184, %198 : vector<2x128xf32>
    %200 = arith.addf %162, %199 : vector<2x128xf32>
    %c32 = arith.constant 32 : index
    %201 = memref.load %arg3[%c32] : memref<63xf32, #tpu.memory_space<smem>>
    %202 = vector.broadcast %201 : f32 to vector<2x128xf32>
    %203 = arith.mulf %184, %202 : vector<2x128xf32>
    %204 = arith.addf %166, %203 : vector<2x128xf32>
    %c39 = arith.constant 39 : index
    %205 = memref.load %arg3[%c39] : memref<63xf32, #tpu.memory_space<smem>>
    %206 = vector.broadcast %205 : f32 to vector<2x128xf32>
    %207 = arith.mulf %184, %206 : vector<2x128xf32>
    %208 = arith.addf %170, %207 : vector<2x128xf32>
    %c46 = arith.constant 46 : index
    %209 = memref.load %arg3[%c46] : memref<63xf32, #tpu.memory_space<smem>>
    %210 = vector.broadcast %209 : f32 to vector<2x128xf32>
    %211 = arith.mulf %184, %210 : vector<2x128xf32>
    %212 = arith.addf %174, %211 : vector<2x128xf32>
    %c53 = arith.constant 53 : index
    %213 = memref.load %arg3[%c53] : memref<63xf32, #tpu.memory_space<smem>>
    %214 = vector.broadcast %213 : f32 to vector<2x128xf32>
    %215 = arith.mulf %184, %214 : vector<2x128xf32>
    %216 = arith.addf %178, %215 : vector<2x128xf32>
    %c60 = arith.constant 60 : index
    %217 = memref.load %arg3[%c60] : memref<63xf32, #tpu.memory_space<smem>>
    %218 = vector.broadcast %217 : f32 to vector<2x128xf32>
    %219 = arith.mulf %184, %218 : vector<2x128xf32>
    %220 = arith.addf %182, %219 : vector<2x128xf32>
    %c190_i32 = arith.constant 190 : i32
    %221 = tpu.dynamic_rotate %3 by %c190_i32 dim 1 : vector<2x256xf32>, i32 -> vector<2x256xf32>
    %222 = vector.extract_strided_slice %221 {offsets = [0, 0], sizes = [2, 128], strides = [1, 1]} : vector<2x256xf32> to vector<2x128xf32>
    %c5_9 = arith.constant 5 : index
    %223 = memref.load %arg3[%c5_9] : memref<63xf32, #tpu.memory_space<smem>>
    %224 = vector.broadcast %223 : f32 to vector<2x128xf32>
    %225 = arith.mulf %222, %224 : vector<2x128xf32>
    %226 = arith.addf %188, %225 : vector<2x128xf32>
    %c12 = arith.constant 12 : index
    %227 = memref.load %arg3[%c12] : memref<63xf32, #tpu.memory_space<smem>>
    %228 = vector.broadcast %227 : f32 to vector<2x128xf32>
    %229 = arith.mulf %222, %228 : vector<2x128xf32>
    %230 = arith.addf %192, %229 : vector<2x128xf32>
    %c19 = arith.constant 19 : index
    %231 = memref.load %arg3[%c19] : memref<63xf32, #tpu.memory_space<smem>>
    %232 = vector.broadcast %231 : f32 to vector<2x128xf32>
    %233 = arith.mulf %222, %232 : vector<2x128xf32>
    %234 = arith.addf %196, %233 : vector<2x128xf32>
    %c26 = arith.constant 26 : index
    %235 = memref.load %arg3[%c26] : memref<63xf32, #tpu.memory_space<smem>>
    %236 = vector.broadcast %235 : f32 to vector<2x128xf32>
    %237 = arith.mulf %222, %236 : vector<2x128xf32>
    %238 = arith.addf %200, %237 : vector<2x128xf32>
    %c33 = arith.constant 33 : index
    %239 = memref.load %arg3[%c33] : memref<63xf32, #tpu.memory_space<smem>>
    %240 = vector.broadcast %239 : f32 to vector<2x128xf32>
    %241 = arith.mulf %222, %240 : vector<2x128xf32>
    %242 = arith.addf %204, %241 : vector<2x128xf32>
    %c40 = arith.constant 40 : index
    %243 = memref.load %arg3[%c40] : memref<63xf32, #tpu.memory_space<smem>>
    %244 = vector.broadcast %243 : f32 to vector<2x128xf32>
    %245 = arith.mulf %222, %244 : vector<2x128xf32>
    %246 = arith.addf %208, %245 : vector<2x128xf32>
    %c47 = arith.constant 47 : index
    %247 = memref.load %arg3[%c47] : memref<63xf32, #tpu.memory_space<smem>>
    %248 = vector.broadcast %247 : f32 to vector<2x128xf32>
    %249 = arith.mulf %222, %248 : vector<2x128xf32>
    %250 = arith.addf %212, %249 : vector<2x128xf32>
    %c54 = arith.constant 54 : index
    %251 = memref.load %arg3[%c54] : memref<63xf32, #tpu.memory_space<smem>>
    %252 = vector.broadcast %251 : f32 to vector<2x128xf32>
    %253 = arith.mulf %222, %252 : vector<2x128xf32>
    %254 = arith.addf %216, %253 : vector<2x128xf32>
    %c61 = arith.constant 61 : index
    %255 = memref.load %arg3[%c61] : memref<63xf32, #tpu.memory_space<smem>>
    %256 = vector.broadcast %255 : f32 to vector<2x128xf32>
    %257 = arith.mulf %222, %256 : vector<2x128xf32>
    %258 = arith.addf %220, %257 : vector<2x128xf32>
    %c189_i32 = arith.constant 189 : i32
    %259 = tpu.dynamic_rotate %3 by %c189_i32 dim 1 : vector<2x256xf32>, i32 -> vector<2x256xf32>
    %260 = vector.extract_strided_slice %259 {offsets = [0, 0], sizes = [2, 128], strides = [1, 1]} : vector<2x256xf32> to vector<2x128xf32>
    %c6_10 = arith.constant 6 : index
    %261 = memref.load %arg3[%c6_10] : memref<63xf32, #tpu.memory_space<smem>>
    %262 = vector.broadcast %261 : f32 to vector<2x128xf32>
    %263 = arith.mulf %260, %262 : vector<2x128xf32>
    %264 = arith.addf %226, %263 : vector<2x128xf32>
    %c13 = arith.constant 13 : index
    %265 = memref.load %arg3[%c13] : memref<63xf32, #tpu.memory_space<smem>>
    %266 = vector.broadcast %265 : f32 to vector<2x128xf32>
    %267 = arith.mulf %260, %266 : vector<2x128xf32>
    %268 = arith.addf %230, %267 : vector<2x128xf32>
    %c20 = arith.constant 20 : index
    %269 = memref.load %arg3[%c20] : memref<63xf32, #tpu.memory_space<smem>>
    %270 = vector.broadcast %269 : f32 to vector<2x128xf32>
    %271 = arith.mulf %260, %270 : vector<2x128xf32>
    %272 = arith.addf %234, %271 : vector<2x128xf32>
    %c27 = arith.constant 27 : index
    %273 = memref.load %arg3[%c27] : memref<63xf32, #tpu.memory_space<smem>>
    %274 = vector.broadcast %273 : f32 to vector<2x128xf32>
    %275 = arith.mulf %260, %274 : vector<2x128xf32>
    %276 = arith.addf %238, %275 : vector<2x128xf32>
    %c34 = arith.constant 34 : index
    %277 = memref.load %arg3[%c34] : memref<63xf32, #tpu.memory_space<smem>>
    %278 = vector.broadcast %277 : f32 to vector<2x128xf32>
    %279 = arith.mulf %260, %278 : vector<2x128xf32>
    %280 = arith.addf %242, %279 : vector<2x128xf32>
    %c41 = arith.constant 41 : index
    %281 = memref.load %arg3[%c41] : memref<63xf32, #tpu.memory_space<smem>>
    %282 = vector.broadcast %281 : f32 to vector<2x128xf32>
    %283 = arith.mulf %260, %282 : vector<2x128xf32>
    %284 = arith.addf %246, %283 : vector<2x128xf32>
    %c48 = arith.constant 48 : index
    %285 = memref.load %arg3[%c48] : memref<63xf32, #tpu.memory_space<smem>>
    %286 = vector.broadcast %285 : f32 to vector<2x128xf32>
    %287 = arith.mulf %260, %286 : vector<2x128xf32>
    %288 = arith.addf %250, %287 : vector<2x128xf32>
    %c55 = arith.constant 55 : index
    %289 = memref.load %arg3[%c55] : memref<63xf32, #tpu.memory_space<smem>>
    %290 = vector.broadcast %289 : f32 to vector<2x128xf32>
    %291 = arith.mulf %260, %290 : vector<2x128xf32>
    %292 = arith.addf %254, %291 : vector<2x128xf32>
    %c62 = arith.constant 62 : index
    %293 = memref.load %arg3[%c62] : memref<63xf32, #tpu.memory_space<smem>>
    %294 = vector.broadcast %293 : f32 to vector<2x128xf32>
    %295 = arith.mulf %260, %294 : vector<2x128xf32>
    %296 = arith.addf %258, %295 : vector<2x128xf32>
    %297 = vector.shape_cast %264 : vector<2x128xf32> to vector<2x1x128xf32>
    %298 = vector.shape_cast %268 : vector<2x128xf32> to vector<2x1x128xf32>
    %299 = vector.shape_cast %272 : vector<2x128xf32> to vector<2x1x128xf32>
    %300 = vector.shape_cast %276 : vector<2x128xf32> to vector<2x1x128xf32>
    %301 = vector.shape_cast %280 : vector<2x128xf32> to vector<2x1x128xf32>
    %302 = vector.shape_cast %284 : vector<2x128xf32> to vector<2x1x128xf32>
    %303 = vector.shape_cast %288 : vector<2x128xf32> to vector<2x1x128xf32>
    %304 = vector.shape_cast %292 : vector<2x128xf32> to vector<2x1x128xf32>
    %305 = vector.shape_cast %296 : vector<2x128xf32> to vector<2x1x128xf32>
    %306 = tpu.concatenate %297, %298, %299, %300, %301, %302, %303, %304, %305 in 1 : vector<2x1x128xf32>, vector<2x1x128xf32>, vector<2x1x128xf32>, vector<2x1x128xf32>, vector<2x1x128xf32>, vector<2x1x128xf32>, vector<2x1x128xf32>, vector<2x1x128xf32>, vector<2x1x128xf32> -> vector<2x9x128xf32>
    %c0_11 = arith.constant 0 : index
    %c0_12 = arith.constant 0 : index
    %c0_13 = arith.constant 0 : index
    %307 = vector.load %arg9[%c0_11, %c0_12, %c0_13] : memref<2x16x128xf32, #tpu.memory_space<vmem>>, vector<2x9x128xf32>
    tpu.vector_store %arg9[%c0_11, %c0_12, %c0_13], %306 {strides = array<i32>} : memref<2x16x128xf32, #tpu.memory_space<vmem>>, vector<2x9x128xf32>,
    %cst = arith.constant 0xFF800000 : f32
    %308 = vector.broadcast %cst : f32 to vector<2x256xf32>
    %309 = arith.select %12, %3, %308 : vector<2x256xi1>, vector<2x256xf32>
    %c255_i32 = arith.constant 255 : i32
    %310 = tpu.dynamic_rotate %309 by %c255_i32 dim 1 : vector<2x256xf32>, i32 -> vector<2x256xf32>
    %311 = arith.maximumf %309, %310 : vector<2x256xf32>
    %c254_i32 = arith.constant 254 : i32
    %312 = tpu.dynamic_rotate %309 by %c254_i32 dim 1 : vector<2x256xf32>, i32 -> vector<2x256xf32>
    %313 = arith.maximumf %311, %312 : vector<2x256xf32>
    %c1_i32 = arith.constant 1 : i32
    %314 = tpu.dynamic_rotate %313 by %c1_i32 dim 1 : vector<2x256xf32>, i32 -> vector<2x256xf32>
    %cst_14 = arith.constant 0.000000e+00 : f32
    %315 = vector.broadcast %cst_14 : f32 to vector<2x256xf32>
    %316 = arith.select %12, %314, %315 : vector<2x256xi1>, vector<2x256xf32>
    %c255_i32_15 = arith.constant 255 : i32
    %317 = tpu.dynamic_rotate %316 by %c255_i32_15 dim 1 : vector<2x256xf32>, i32 -> vector<2x256xf32>
    %318 = arith.addf %316, %317 : vector<2x256xf32>
    %c254_i32_16 = arith.constant 254 : i32
    %319 = tpu.dynamic_rotate %316 by %c254_i32_16 dim 1 : vector<2x256xf32>, i32 -> vector<2x256xf32>
    %320 = arith.addf %318, %319 : vector<2x256xf32>
    %c1_i32_17 = arith.constant 1 : i32
    %321 = tpu.dynamic_rotate %320 by %c1_i32_17 dim 1 : vector<2x256xf32>, i32 -> vector<2x256xf32>
    %cst_18 = arith.constant 0.333333343 : f32
    %322 = vector.broadcast %cst_18 : f32 to vector<2x256xf32>
    %323 = arith.mulf %321, %322 : vector<2x256xf32>
    %cst_19 = arith.constant 0.000000e+00 : f32
    %324 = vector.broadcast %cst_19 : f32 to vector<2x256xf32>
    %325 = arith.select %12, %323, %324 : vector<2x256xi1>, vector<2x256xf32>
    %c0_20 = arith.constant 0 : index
    %326 = memref.load %arg7[%c0_20] : memref<4xf32, #tpu.memory_space<smem>>
    %327 = vector.broadcast %326 : f32 to vector<2x128xf32>
    %c1_21 = arith.constant 1 : index
    %328 = memref.load %arg7[%c1_21] : memref<4xf32, #tpu.memory_space<smem>>
    %329 = vector.broadcast %328 : f32 to vector<2x128xf32>
    %c2_22 = arith.constant 2 : index
    %330 = memref.load %arg7[%c2_22] : memref<4xf32, #tpu.memory_space<smem>>
    %331 = vector.broadcast %330 : f32 to vector<2x128xf32>
    %c3_23 = arith.constant 3 : index
    %332 = memref.load %arg7[%c3_23] : memref<4xf32, #tpu.memory_space<smem>>
    %333 = vector.broadcast %332 : f32 to vector<2x128xf32>
    %c201_i32 = arith.constant 201 : i32
    %334 = tpu.dynamic_rotate %325 by %c201_i32 dim 1 : vector<2x256xf32>, i32 -> vector<2x256xf32>
    %335 = vector.extract_strided_slice %334 {offsets = [0, 0], sizes = [2, 128], strides = [1, 1]} : vector<2x256xf32> to vector<2x128xf32>
    %c0_24 = arith.constant 0 : index
    %336 = memref.load %arg4[%c0_24] : memref<28xf32, #tpu.memory_space<smem>>
    %337 = vector.broadcast %336 : f32 to vector<2x128xf32>
    %338 = arith.mulf %335, %337 : vector<2x128xf32>
    %339 = arith.addf %327, %338 : vector<2x128xf32>
    %c7_25 = arith.constant 7 : index
    %340 = memref.load %arg4[%c7_25] : memref<28xf32, #tpu.memory_space<smem>>
    %341 = vector.broadcast %340 : f32 to vector<2x128xf32>
    %342 = arith.mulf %335, %341 : vector<2x128xf32>
    %343 = arith.addf %329, %342 : vector<2x128xf32>
    %c14_26 = arith.constant 14 : index
    %344 = memref.load %arg4[%c14_26] : memref<28xf32, #tpu.memory_space<smem>>
    %345 = vector.broadcast %344 : f32 to vector<2x128xf32>
    %346 = arith.mulf %335, %345 : vector<2x128xf32>
    %347 = arith.addf %331, %346 : vector<2x128xf32>
    %c21_27 = arith.constant 21 : index
    %348 = memref.load %arg4[%c21_27] : memref<28xf32, #tpu.memory_space<smem>>
    %349 = vector.broadcast %348 : f32 to vector<2x128xf32>
    %350 = arith.mulf %335, %349 : vector<2x128xf32>
    %351 = arith.addf %333, %350 : vector<2x128xf32>
    %c198_i32 = arith.constant 198 : i32
    %352 = tpu.dynamic_rotate %325 by %c198_i32 dim 1 : vector<2x256xf32>, i32 -> vector<2x256xf32>
    %353 = vector.extract_strided_slice %352 {offsets = [0, 0], sizes = [2, 128], strides = [1, 1]} : vector<2x256xf32> to vector<2x128xf32>
    %c1_28 = arith.constant 1 : index
    %354 = memref.load %arg4[%c1_28] : memref<28xf32, #tpu.memory_space<smem>>
    %355 = vector.broadcast %354 : f32 to vector<2x128xf32>
    %356 = arith.mulf %353, %355 : vector<2x128xf32>
    %357 = arith.addf %339, %356 : vector<2x128xf32>
    %c8_29 = arith.constant 8 : index
    %358 = memref.load %arg4[%c8_29] : memref<28xf32, #tpu.memory_space<smem>>
    %359 = vector.broadcast %358 : f32 to vector<2x128xf32>
    %360 = arith.mulf %353, %359 : vector<2x128xf32>
    %361 = arith.addf %343, %360 : vector<2x128xf32>
    %c15_30 = arith.constant 15 : index
    %362 = memref.load %arg4[%c15_30] : memref<28xf32, #tpu.memory_space<smem>>
    %363 = vector.broadcast %362 : f32 to vector<2x128xf32>
    %364 = arith.mulf %353, %363 : vector<2x128xf32>
    %365 = arith.addf %347, %364 : vector<2x128xf32>
    %c22_31 = arith.constant 22 : index
    %366 = memref.load %arg4[%c22_31] : memref<28xf32, #tpu.memory_space<smem>>
    %367 = vector.broadcast %366 : f32 to vector<2x128xf32>
    %368 = arith.mulf %353, %367 : vector<2x128xf32>
    %369 = arith.addf %351, %368 : vector<2x128xf32>
    %c195_i32_32 = arith.constant 195 : i32
    %370 = tpu.dynamic_rotate %325 by %c195_i32_32 dim 1 : vector<2x256xf32>, i32 -> vector<2x256xf32>
    %371 = vector.extract_strided_slice %370 {offsets = [0, 0], sizes = [2, 128], strides = [1, 1]} : vector<2x256xf32> to vector<2x128xf32>
    %c2_33 = arith.constant 2 : index
    %372 = memref.load %arg4[%c2_33] : memref<28xf32, #tpu.memory_space<smem>>
    %373 = vector.broadcast %372 : f32 to vector<2x128xf32>
    %374 = arith.mulf %371, %373 : vector<2x128xf32>
    %375 = arith.addf %357, %374 : vector<2x128xf32>
    %c9_34 = arith.constant 9 : index
    %376 = memref.load %arg4[%c9_34] : memref<28xf32, #tpu.memory_space<smem>>
    %377 = vector.broadcast %376 : f32 to vector<2x128xf32>
    %378 = arith.mulf %371, %377 : vector<2x128xf32>
    %379 = arith.addf %361, %378 : vector<2x128xf32>
    %c16_35 = arith.constant 16 : index
    %380 = memref.load %arg4[%c16_35] : memref<28xf32, #tpu.memory_space<smem>>
    %381 = vector.broadcast %380 : f32 to vector<2x128xf32>
    %382 = arith.mulf %371, %381 : vector<2x128xf32>
    %383 = arith.addf %365, %382 : vector<2x128xf32>
    %c23_36 = arith.constant 23 : index
    %384 = memref.load %arg4[%c23_36] : memref<28xf32, #tpu.memory_space<smem>>
    %385 = vector.broadcast %384 : f32 to vector<2x128xf32>
    %386 = arith.mulf %371, %385 : vector<2x128xf32>
    %387 = arith.addf %369, %386 : vector<2x128xf32>
    %c192_i32_37 = arith.constant 192 : i32
    %388 = tpu.dynamic_rotate %325 by %c192_i32_37 dim 1 : vector<2x256xf32>, i32 -> vector<2x256xf32>
    %389 = vector.extract_strided_slice %388 {offsets = [0, 0], sizes = [2, 128], strides = [1, 1]} : vector<2x256xf32> to vector<2x128xf32>
    %c3_38 = arith.constant 3 : index
    %390 = memref.load %arg4[%c3_38] : memref<28xf32, #tpu.memory_space<smem>>
    %391 = vector.broadcast %390 : f32 to vector<2x128xf32>
    %392 = arith.mulf %389, %391 : vector<2x128xf32>
    %393 = arith.addf %375, %392 : vector<2x128xf32>
    %c10_39 = arith.constant 10 : index
    %394 = memref.load %arg4[%c10_39] : memref<28xf32, #tpu.memory_space<smem>>
    %395 = vector.broadcast %394 : f32 to vector<2x128xf32>
    %396 = arith.mulf %389, %395 : vector<2x128xf32>
    %397 = arith.addf %379, %396 : vector<2x128xf32>
    %c17_40 = arith.constant 17 : index
    %398 = memref.load %arg4[%c17_40] : memref<28xf32, #tpu.memory_space<smem>>
    %399 = vector.broadcast %398 : f32 to vector<2x128xf32>
    %400 = arith.mulf %389, %399 : vector<2x128xf32>
    %401 = arith.addf %383, %400 : vector<2x128xf32>
    %c24_41 = arith.constant 24 : index
    %402 = memref.load %arg4[%c24_41] : memref<28xf32, #tpu.memory_space<smem>>
    %403 = vector.broadcast %402 : f32 to vector<2x128xf32>
    %404 = arith.mulf %389, %403 : vector<2x128xf32>
    %405 = arith.addf %387, %404 : vector<2x128xf32>
    %c189_i32_42 = arith.constant 189 : i32
    %406 = tpu.dynamic_rotate %325 by %c189_i32_42 dim 1 : vector<2x256xf32>, i32 -> vector<2x256xf32>
    %407 = vector.extract_strided_slice %406 {offsets = [0, 0], sizes = [2, 128], strides = [1, 1]} : vector<2x256xf32> to vector<2x128xf32>
    %c4_43 = arith.constant 4 : index
    %408 = memref.load %arg4[%c4_43] : memref<28xf32, #tpu.memory_space<smem>>
    %409 = vector.broadcast %408 : f32 to vector<2x128xf32>
    %410 = arith.mulf %407, %409 : vector<2x128xf32>
    %411 = arith.addf %393, %410 : vector<2x128xf32>
    %c11_44 = arith.constant 11 : index
    %412 = memref.load %arg4[%c11_44] : memref<28xf32, #tpu.memory_space<smem>>
    %413 = vector.broadcast %412 : f32 to vector<2x128xf32>
    %414 = arith.mulf %407, %413 : vector<2x128xf32>
    %415 = arith.addf %397, %414 : vector<2x128xf32>
    %c18_45 = arith.constant 18 : index
    %416 = memref.load %arg4[%c18_45] : memref<28xf32, #tpu.memory_space<smem>>
    %417 = vector.broadcast %416 : f32 to vector<2x128xf32>
    %418 = arith.mulf %407, %417 : vector<2x128xf32>
    %419 = arith.addf %401, %418 : vector<2x128xf32>
    %c25_46 = arith.constant 25 : index
    %420 = memref.load %arg4[%c25_46] : memref<28xf32, #tpu.memory_space<smem>>
    %421 = vector.broadcast %420 : f32 to vector<2x128xf32>
    %422 = arith.mulf %407, %421 : vector<2x128xf32>
    %423 = arith.addf %405, %422 : vector<2x128xf32>
    %c186_i32 = arith.constant 186 : i32
    %424 = tpu.dynamic_rotate %325 by %c186_i32 dim 1 : vector<2x256xf32>, i32 -> vector<2x256xf32>
    %425 = vector.extract_strided_slice %424 {offsets = [0, 0], sizes = [2, 128], strides = [1, 1]} : vector<2x256xf32> to vector<2x128xf32>
    %c5_47 = arith.constant 5 : index
    %426 = memref.load %arg4[%c5_47] : memref<28xf32, #tpu.memory_space<smem>>
    %427 = vector.broadcast %426 : f32 to vector<2x128xf32>
    %428 = arith.mulf %425, %427 : vector<2x128xf32>
    %429 = arith.addf %411, %428 : vector<2x128xf32>
    %c12_48 = arith.constant 12 : index
    %430 = memref.load %arg4[%c12_48] : memref<28xf32, #tpu.memory_space<smem>>
    %431 = vector.broadcast %430 : f32 to vector<2x128xf32>
    %432 = arith.mulf %425, %431 : vector<2x128xf32>
    %433 = arith.addf %415, %432 : vector<2x128xf32>
    %c19_49 = arith.constant 19 : index
    %434 = memref.load %arg4[%c19_49] : memref<28xf32, #tpu.memory_space<smem>>
    %435 = vector.broadcast %434 : f32 to vector<2x128xf32>
    %436 = arith.mulf %425, %435 : vector<2x128xf32>
    %437 = arith.addf %419, %436 : vector<2x128xf32>
    %c26_50 = arith.constant 26 : index
    %438 = memref.load %arg4[%c26_50] : memref<28xf32, #tpu.memory_space<smem>>
    %439 = vector.broadcast %438 : f32 to vector<2x128xf32>
    %440 = arith.mulf %425, %439 : vector<2x128xf32>
    %441 = arith.addf %423, %440 : vector<2x128xf32>
    %c183_i32 = arith.constant 183 : i32
    %442 = tpu.dynamic_rotate %325 by %c183_i32 dim 1 : vector<2x256xf32>, i32 -> vector<2x256xf32>
    %443 = vector.extract_strided_slice %442 {offsets = [0, 0], sizes = [2, 128], strides = [1, 1]} : vector<2x256xf32> to vector<2x128xf32>
    %c6_51 = arith.constant 6 : index
    %444 = memref.load %arg4[%c6_51] : memref<28xf32, #tpu.memory_space<smem>>
    %445 = vector.broadcast %444 : f32 to vector<2x128xf32>
    %446 = arith.mulf %443, %445 : vector<2x128xf32>
    %447 = arith.addf %429, %446 : vector<2x128xf32>
    %c13_52 = arith.constant 13 : index
    %448 = memref.load %arg4[%c13_52] : memref<28xf32, #tpu.memory_space<smem>>
    %449 = vector.broadcast %448 : f32 to vector<2x128xf32>
    %450 = arith.mulf %443, %449 : vector<2x128xf32>
    %451 = arith.addf %433, %450 : vector<2x128xf32>
    %c20_53 = arith.constant 20 : index
    %452 = memref.load %arg4[%c20_53] : memref<28xf32, #tpu.memory_space<smem>>
    %453 = vector.broadcast %452 : f32 to vector<2x128xf32>
    %454 = arith.mulf %443, %453 : vector<2x128xf32>
    %455 = arith.addf %437, %454 : vector<2x128xf32>
    %c27_54 = arith.constant 27 : index
    %456 = memref.load %arg4[%c27_54] : memref<28xf32, #tpu.memory_space<smem>>
    %457 = vector.broadcast %456 : f32 to vector<2x128xf32>
    %458 = arith.mulf %443, %457 : vector<2x128xf32>
    %459 = arith.addf %441, %458 : vector<2x128xf32>
    %460 = vector.shape_cast %447 : vector<2x128xf32> to vector<2x1x128xf32>
    %461 = vector.shape_cast %451 : vector<2x128xf32> to vector<2x1x128xf32>
    %462 = vector.shape_cast %455 : vector<2x128xf32> to vector<2x1x128xf32>
    %463 = vector.shape_cast %459 : vector<2x128xf32> to vector<2x1x128xf32>
    %464 = tpu.concatenate %460, %461, %462, %463 in 1 : vector<2x1x128xf32>, vector<2x1x128xf32>, vector<2x1x128xf32>, vector<2x1x128xf32> -> vector<2x4x128xf32>
    %c0_55 = arith.constant 0 : index
    %c9_56 = arith.constant 9 : index
    %c0_57 = arith.constant 0 : index
    %465 = vector.load %arg9[%c0_55, %c9_56, %c0_57] : memref<2x16x128xf32, #tpu.memory_space<vmem>>, vector<2x4x128xf32>
    tpu.vector_store %arg9[%c0_55, %c9_56, %c0_57], %464 {strides = array<i32>} : memref<2x16x128xf32, #tpu.memory_space<vmem>>, vector<2x4x128xf32>,
    %cst_58 = arith.constant 0xFF800000 : f32
    %466 = vector.broadcast %cst_58 : f32 to vector<2x256xf32>
    %467 = arith.select %12, %3, %466 : vector<2x256xi1>, vector<2x256xf32>
    %c255_i32_59 = arith.constant 255 : i32
    %468 = tpu.dynamic_rotate %467 by %c255_i32_59 dim 1 : vector<2x256xf32>, i32 -> vector<2x256xf32>
    %469 = arith.maximumf %467, %468 : vector<2x256xf32>
    %c254_i32_60 = arith.constant 254 : i32
    %470 = tpu.dynamic_rotate %469 by %c254_i32_60 dim 1 : vector<2x256xf32>, i32 -> vector<2x256xf32>
    %471 = arith.maximumf %469, %470 : vector<2x256xf32>
    %c252_i32 = arith.constant 252 : i32
    %472 = tpu.dynamic_rotate %471 by %c252_i32 dim 1 : vector<2x256xf32>, i32 -> vector<2x256xf32>
    %473 = arith.maximumf %471, %472 : vector<2x256xf32>
    %c248_i32 = arith.constant 248 : i32
    %474 = tpu.dynamic_rotate %467 by %c248_i32 dim 1 : vector<2x256xf32>, i32 -> vector<2x256xf32>
    %475 = arith.maximumf %473, %474 : vector<2x256xf32>
    %c4_i32 = arith.constant 4 : i32
    %476 = tpu.dynamic_rotate %475 by %c4_i32 dim 1 : vector<2x256xf32>, i32 -> vector<2x256xf32>
    %cst_61 = arith.constant 0.000000e+00 : f32
    %477 = vector.broadcast %cst_61 : f32 to vector<2x256xf32>
    %478 = arith.select %12, %476, %477 : vector<2x256xi1>, vector<2x256xf32>
    %c255_i32_62 = arith.constant 255 : i32
    %479 = tpu.dynamic_rotate %478 by %c255_i32_62 dim 1 : vector<2x256xf32>, i32 -> vector<2x256xf32>
    %480 = arith.addf %478, %479 : vector<2x256xf32>
    %c254_i32_63 = arith.constant 254 : i32
    %481 = tpu.dynamic_rotate %480 by %c254_i32_63 dim 1 : vector<2x256xf32>, i32 -> vector<2x256xf32>
    %482 = arith.addf %480, %481 : vector<2x256xf32>
    %c252_i32_64 = arith.constant 252 : i32
    %483 = tpu.dynamic_rotate %482 by %c252_i32_64 dim 1 : vector<2x256xf32>, i32 -> vector<2x256xf32>
    %484 = arith.addf %482, %483 : vector<2x256xf32>
    %c248_i32_65 = arith.constant 248 : i32
    %485 = tpu.dynamic_rotate %478 by %c248_i32_65 dim 1 : vector<2x256xf32>, i32 -> vector<2x256xf32>
    %486 = arith.addf %484, %485 : vector<2x256xf32>
    %c4_i32_66 = arith.constant 4 : i32
    %487 = tpu.dynamic_rotate %486 by %c4_i32_66 dim 1 : vector<2x256xf32>, i32 -> vector<2x256xf32>
    %cst_67 = arith.constant 0.111111112 : f32
    %488 = vector.broadcast %cst_67 : f32 to vector<2x256xf32>
    %489 = arith.mulf %487, %488 : vector<2x256xf32>
    %cst_68 = arith.constant 0.000000e+00 : f32
    %490 = vector.broadcast %cst_68 : f32 to vector<2x256xf32>
    %491 = arith.select %12, %489, %490 : vector<2x256xi1>, vector<2x256xf32>
    %c0_69 = arith.constant 0 : index
    %492 = memref.load %arg8[%c0_69] : memref<3xf32, #tpu.memory_space<smem>>
    %493 = vector.broadcast %492 : f32 to vector<2x128xf32>
    %c1_70 = arith.constant 1 : index
    %494 = memref.load %arg8[%c1_70] : memref<3xf32, #tpu.memory_space<smem>>
    %495 = vector.broadcast %494 : f32 to vector<2x128xf32>
    %c2_71 = arith.constant 2 : index
    %496 = memref.load %arg8[%c2_71] : memref<3xf32, #tpu.memory_space<smem>>
    %497 = vector.broadcast %496 : f32 to vector<2x128xf32>
    %c219_i32 = arith.constant 219 : i32
    %498 = tpu.dynamic_rotate %491 by %c219_i32 dim 1 : vector<2x256xf32>, i32 -> vector<2x256xf32>
    %499 = vector.extract_strided_slice %498 {offsets = [0, 0], sizes = [2, 128], strides = [1, 1]} : vector<2x256xf32> to vector<2x128xf32>
    %c0_72 = arith.constant 0 : index
    %500 = memref.load %arg5[%c0_72] : memref<21xf32, #tpu.memory_space<smem>>
    %501 = vector.broadcast %500 : f32 to vector<2x128xf32>
    %502 = arith.mulf %499, %501 : vector<2x128xf32>
    %503 = arith.addf %493, %502 : vector<2x128xf32>
    %c7_73 = arith.constant 7 : index
    %504 = memref.load %arg5[%c7_73] : memref<21xf32, #tpu.memory_space<smem>>
    %505 = vector.broadcast %504 : f32 to vector<2x128xf32>
    %506 = arith.mulf %499, %505 : vector<2x128xf32>
    %507 = arith.addf %495, %506 : vector<2x128xf32>
    %c14_74 = arith.constant 14 : index
    %508 = memref.load %arg5[%c14_74] : memref<21xf32, #tpu.memory_space<smem>>
    %509 = vector.broadcast %508 : f32 to vector<2x128xf32>
    %510 = arith.mulf %499, %509 : vector<2x128xf32>
    %511 = arith.addf %497, %510 : vector<2x128xf32>
    %c210_i32 = arith.constant 210 : i32
    %512 = tpu.dynamic_rotate %491 by %c210_i32 dim 1 : vector<2x256xf32>, i32 -> vector<2x256xf32>
    %513 = vector.extract_strided_slice %512 {offsets = [0, 0], sizes = [2, 128], strides = [1, 1]} : vector<2x256xf32> to vector<2x128xf32>
    %c1_75 = arith.constant 1 : index
    %514 = memref.load %arg5[%c1_75] : memref<21xf32, #tpu.memory_space<smem>>
    %515 = vector.broadcast %514 : f32 to vector<2x128xf32>
    %516 = arith.mulf %513, %515 : vector<2x128xf32>
    %517 = arith.addf %503, %516 : vector<2x128xf32>
    %c8_76 = arith.constant 8 : index
    %518 = memref.load %arg5[%c8_76] : memref<21xf32, #tpu.memory_space<smem>>
    %519 = vector.broadcast %518 : f32 to vector<2x128xf32>
    %520 = arith.mulf %513, %519 : vector<2x128xf32>
    %521 = arith.addf %507, %520 : vector<2x128xf32>
    %c15_77 = arith.constant 15 : index
    %522 = memref.load %arg5[%c15_77] : memref<21xf32, #tpu.memory_space<smem>>
    %523 = vector.broadcast %522 : f32 to vector<2x128xf32>
    %524 = arith.mulf %513, %523 : vector<2x128xf32>
    %525 = arith.addf %511, %524 : vector<2x128xf32>
    %c201_i32_78 = arith.constant 201 : i32
    %526 = tpu.dynamic_rotate %491 by %c201_i32_78 dim 1 : vector<2x256xf32>, i32 -> vector<2x256xf32>
    %527 = vector.extract_strided_slice %526 {offsets = [0, 0], sizes = [2, 128], strides = [1, 1]} : vector<2x256xf32> to vector<2x128xf32>
    %c2_79 = arith.constant 2 : index
    %528 = memref.load %arg5[%c2_79] : memref<21xf32, #tpu.memory_space<smem>>
    %529 = vector.broadcast %528 : f32 to vector<2x128xf32>
    %530 = arith.mulf %527, %529 : vector<2x128xf32>
    %531 = arith.addf %517, %530 : vector<2x128xf32>
    %c9_80 = arith.constant 9 : index
    %532 = memref.load %arg5[%c9_80] : memref<21xf32, #tpu.memory_space<smem>>
    %533 = vector.broadcast %532 : f32 to vector<2x128xf32>
    %534 = arith.mulf %527, %533 : vector<2x128xf32>
    %535 = arith.addf %521, %534 : vector<2x128xf32>
    %c16_81 = arith.constant 16 : index
    %536 = memref.load %arg5[%c16_81] : memref<21xf32, #tpu.memory_space<smem>>
    %537 = vector.broadcast %536 : f32 to vector<2x128xf32>
    %538 = arith.mulf %527, %537 : vector<2x128xf32>
    %539 = arith.addf %525, %538 : vector<2x128xf32>
    %c192_i32_82 = arith.constant 192 : i32
    %540 = tpu.dynamic_rotate %491 by %c192_i32_82 dim 1 : vector<2x256xf32>, i32 -> vector<2x256xf32>
    %541 = vector.extract_strided_slice %540 {offsets = [0, 0], sizes = [2, 128], strides = [1, 1]} : vector<2x256xf32> to vector<2x128xf32>
    %c3_83 = arith.constant 3 : index
    %542 = memref.load %arg5[%c3_83] : memref<21xf32, #tpu.memory_space<smem>>
    %543 = vector.broadcast %542 : f32 to vector<2x128xf32>
    %544 = arith.mulf %541, %543 : vector<2x128xf32>
    %545 = arith.addf %531, %544 : vector<2x128xf32>
    %c10_84 = arith.constant 10 : index
    %546 = memref.load %arg5[%c10_84] : memref<21xf32, #tpu.memory_space<smem>>
    %547 = vector.broadcast %546 : f32 to vector<2x128xf32>
    %548 = arith.mulf %541, %547 : vector<2x128xf32>
    %549 = arith.addf %535, %548 : vector<2x128xf32>
    %c17_85 = arith.constant 17 : index
    %550 = memref.load %arg5[%c17_85] : memref<21xf32, #tpu.memory_space<smem>>
    %551 = vector.broadcast %550 : f32 to vector<2x128xf32>
    %552 = arith.mulf %541, %551 : vector<2x128xf32>
    %553 = arith.addf %539, %552 : vector<2x128xf32>
    %c183_i32_86 = arith.constant 183 : i32
    %554 = tpu.dynamic_rotate %491 by %c183_i32_86 dim 1 : vector<2x256xf32>, i32 -> vector<2x256xf32>
    %555 = vector.extract_strided_slice %554 {offsets = [0, 0], sizes = [2, 128], strides = [1, 1]} : vector<2x256xf32> to vector<2x128xf32>
    %c4_87 = arith.constant 4 : index
    %556 = memref.load %arg5[%c4_87] : memref<21xf32, #tpu.memory_space<smem>>
    %557 = vector.broadcast %556 : f32 to vector<2x128xf32>
    %558 = arith.mulf %555, %557 : vector<2x128xf32>
    %559 = arith.addf %545, %558 : vector<2x128xf32>
    %c11_88 = arith.constant 11 : index
    %560 = memref.load %arg5[%c11_88] : memref<21xf32, #tpu.memory_space<smem>>
    %561 = vector.broadcast %560 : f32 to vector<2x128xf32>
    %562 = arith.mulf %555, %561 : vector<2x128xf32>
    %563 = arith.addf %549, %562 : vector<2x128xf32>
    %c18_89 = arith.constant 18 : index
    %564 = memref.load %arg5[%c18_89] : memref<21xf32, #tpu.memory_space<smem>>
    %565 = vector.broadcast %564 : f32 to vector<2x128xf32>
    %566 = arith.mulf %555, %565 : vector<2x128xf32>
    %567 = arith.addf %553, %566 : vector<2x128xf32>
    %c174_i32 = arith.constant 174 : i32
    %568 = tpu.dynamic_rotate %491 by %c174_i32 dim 1 : vector<2x256xf32>, i32 -> vector<2x256xf32>
    %569 = vector.extract_strided_slice %568 {offsets = [0, 0], sizes = [2, 128], strides = [1, 1]} : vector<2x256xf32> to vector<2x128xf32>
    %c5_90 = arith.constant 5 : index
    %570 = memref.load %arg5[%c5_90] : memref<21xf32, #tpu.memory_space<smem>>
    %571 = vector.broadcast %570 : f32 to vector<2x128xf32>
    %572 = arith.mulf %569, %571 : vector<2x128xf32>
    %573 = arith.addf %559, %572 : vector<2x128xf32>
    %c12_91 = arith.constant 12 : index
    %574 = memref.load %arg5[%c12_91] : memref<21xf32, #tpu.memory_space<smem>>
    %575 = vector.broadcast %574 : f32 to vector<2x128xf32>
    %576 = arith.mulf %569, %575 : vector<2x128xf32>
    %577 = arith.addf %563, %576 : vector<2x128xf32>
    %c19_92 = arith.constant 19 : index
    %578 = memref.load %arg5[%c19_92] : memref<21xf32, #tpu.memory_space<smem>>
    %579 = vector.broadcast %578 : f32 to vector<2x128xf32>
    %580 = arith.mulf %569, %579 : vector<2x128xf32>
    %581 = arith.addf %567, %580 : vector<2x128xf32>
    %c165_i32 = arith.constant 165 : i32
    %582 = tpu.dynamic_rotate %491 by %c165_i32 dim 1 : vector<2x256xf32>, i32 -> vector<2x256xf32>
    %583 = vector.extract_strided_slice %582 {offsets = [0, 0], sizes = [2, 128], strides = [1, 1]} : vector<2x256xf32> to vector<2x128xf32>
    %c6_93 = arith.constant 6 : index
    %584 = memref.load %arg5[%c6_93] : memref<21xf32, #tpu.memory_space<smem>>
    %585 = vector.broadcast %584 : f32 to vector<2x128xf32>
    %586 = arith.mulf %583, %585 : vector<2x128xf32>
    %587 = arith.addf %573, %586 : vector<2x128xf32>
    %c13_94 = arith.constant 13 : index
    %588 = memref.load %arg5[%c13_94] : memref<21xf32, #tpu.memory_space<smem>>
    %589 = vector.broadcast %588 : f32 to vector<2x128xf32>
    %590 = arith.mulf %583, %589 : vector<2x128xf32>
    %591 = arith.addf %577, %590 : vector<2x128xf32>
    %c20_95 = arith.constant 20 : index
    %592 = memref.load %arg5[%c20_95] : memref<21xf32, #tpu.memory_space<smem>>
    %593 = vector.broadcast %592 : f32 to vector<2x128xf32>
    %594 = arith.mulf %583, %593 : vector<2x128xf32>
    %595 = arith.addf %581, %594 : vector<2x128xf32>
    %596 = vector.shape_cast %587 : vector<2x128xf32> to vector<2x1x128xf32>
    %597 = vector.shape_cast %591 : vector<2x128xf32> to vector<2x1x128xf32>
    %598 = vector.shape_cast %595 : vector<2x128xf32> to vector<2x1x128xf32>
    %599 = tpu.concatenate %596, %597, %598 in 1 : vector<2x1x128xf32>, vector<2x1x128xf32>, vector<2x1x128xf32> -> vector<2x3x128xf32>
    %c0_96 = arith.constant 0 : index
    %c13_97 = arith.constant 13 : index
    %c0_98 = arith.constant 0 : index
    %600 = vector.load %arg9[%c0_96, %c13_97, %c0_98] : memref<2x16x128xf32, #tpu.memory_space<vmem>>, vector<2x3x128xf32>
    tpu.vector_store %arg9[%c0_96, %c13_97, %c0_98], %599 {strides = array<i32>} : memref<2x16x128xf32, #tpu.memory_space<vmem>>, vector<2x3x128xf32>,
    return
  }
  func.func @transform_0(%arg0: i32, %arg1: i32) -> (i32, i32) {
    %c0_i32 = arith.constant 0 : i32
    %c0_i32_0 = arith.constant 0 : i32
    return %arg0, %c0_i32 : i32, i32
  }
  func.func @transform_1(%arg0: i32, %arg1: i32) -> i32 {
    %c0_i32 = arith.constant 0 : i32
    %c0_i32_0 = arith.constant 0 : i32
    return %c0_i32 : i32
  }
  func.func @transform_2(%arg0: i32, %arg1: i32) -> i32 {
    %c0_i32 = arith.constant 0 : i32
    %c0_i32_0 = arith.constant 0 : i32
    return %c0_i32 : i32
  }
  func.func @transform_3(%arg0: i32, %arg1: i32) -> i32 {
    %c0_i32 = arith.constant 0 : i32
    %c0_i32_0 = arith.constant 0 : i32
    return %c0_i32 : i32
  }
  func.func @transform_4(%arg0: i32, %arg1: i32) -> i32 {
    %c0_i32 = arith.constant 0 : i32
    %c0_i32_0 = arith.constant 0 : i32
    return %c0_i32 : i32
  }
  func.func @transform_5(%arg0: i32, %arg1: i32) -> i32 {
    %c0_i32 = arith.constant 0 : i32
    %c0_i32_0 = arith.constant 0 : i32
    return %c0_i32 : i32
  }
  func.func @transform_6(%arg0: i32, %arg1: i32) -> i32 {
    %c0_i32 = arith.constant 0 : i32
    %c0_i32_0 = arith.constant 0 : i32
    return %c0_i32 : i32
  }
  func.func @transform_7(%arg0: i32, %arg1: i32) -> (i32, i32, i32) {
    %c0_i32 = arith.constant 0 : i32
    %c0_i32_0 = arith.constant 0 : i32
    return %arg0, %c0_i32, %arg1 : i32, i32, i32
  }
}

</mosaic_0001>

<llo_original>
// kernel: tpu_custom_call.1
$region0: #{tpu_custom_call.1}
  #allocation0 [shape = 'u32[]', space=smem, size = 0x4, offset = 0x4, fixed_abs, tag = 'smem constant byte address 0x4 - core index']
  #allocation1 [shape = 'u32[144,128]{1,0:T(1,128)}', space=vmem, size = 0x12000, scoped, tag = 'internal scratch']
  %s0 = inlined_call_operand.hbm [shape: f32[2,256], index: 0, kind: input, shape index: {}]
  %s1 = inlined_call_operand.vmem [shape: f32[63], index: 1, kind: input, shape index: {}]
  %s2 = inlined_call_operand.vmem [shape: f32[28], index: 2, kind: input, shape index: {}]
  %s3 = inlined_call_operand.vmem [shape: f32[21], index: 3, kind: input, shape index: {}]
  %s4 = inlined_call_operand.vmem [shape: f32[9], index: 4, kind: input, shape index: {}]
  %s5 = inlined_call_operand.vmem [shape: f32[4], index: 5, kind: input, shape index: {}]
  %s6 = inlined_call_operand.vmem [shape: f32[3], index: 6, kind: input, shape index: {}]
  %s7 = inlined_call_operand.hbm [shape: f32[2,16,128], index: 7, kind: output, shape index: {}]
  %s8 = sld [smem:[#allocation0]]
  $region66: #{tpu_custom_call.1} parent=0
    _
  %s10 = ssub.s32 1, %s8
  %s11 = scalar_select 0, %s10, %s8
  $region1: #{tpu_custom_call.1} parent=0
    #allocation2 [shape = 'u8[2048]{0}', space=vmem, size = 0x800, scoped, tag = 'input window, operand 0, single buffered']
    #allocation3 [shape = 's32[1]{0}', space=sflag, size = 0x4, scoped, tag = 'scoped memory for tpu_custom_call.1']
    #allocation4 [shape = 's32[1]{0}', space=sflag, size = 0x4, scoped, tag = 'scoped memory for tpu_custom_call.1']
    #allocation5 [shape = 's32[1]{0}', space=sflag, size = 0x4, scoped, tag = 'scoped memory for tpu_custom_call.1']
    #allocation6 [shape = 'u8[512]{0}', space=smem, size = 0x200, scoped, tag = 'input window, operand 1, single buffered']
    #allocation7 [shape = 'u8[512]{0}', space=smem, size = 0x200, scoped, tag = 'input window, operand 2, single buffered']
    #allocation8 [shape = 's32[1]{0}', space=sflag, size = 0x4, scoped, tag = 'scoped memory for tpu_custom_call.1']
    #allocation9 [shape = 'u8[512]{0}', space=smem, size = 0x200, scoped, tag = 'input window, operand 3, single buffered']
    #allocation10 [shape = 'u8[512]{0}', space=smem, size = 0x200, scoped, tag = 'input window, operand 4, single buffered']
    #allocation11 [shape = 's32[1]{0}', space=sflag, size = 0x4, scoped, tag = 'scoped memory for tpu_custom_call.1']
    #allocation12 [shape = 'u8[512]{0}', space=smem, size = 0x200, scoped, tag = 'input window, operand 5, single buffered']
    #allocation13 [shape = 'u8[512]{0}', space=smem, size = 0x200, scoped, tag = 'input window, operand 6, single buffered']
    #allocation14 [shape = 's32[1]{0}', space=sflag, size = 0x4, scoped, tag = 'scoped memory for tpu_custom_call.1']
    #allocation15 [shape = 'u8[16384]{0}', space=vmem, size = 0x4000, scoped, tag = 'output window, operand 0, single buffered']
    %12 = vsyncpa [#allocation3], 0
    %13 = vsyncpa [#allocation5], 0
    %14 = vsyncpa [#allocation8], 0
    %15 = vsyncpa [#allocation11], 0
    %16 = vsyncpa [#allocation14], 0
    %17 = vsyncpa [#allocation4], 0
    // Predicated region
    $region2: #{tpu_custom_call.1} parent=1 // pred_check
      _
    $region3: #{tpu_custom_call.1} parent=1 // pred_check_branch
      %19 = sbr.rel (0) target = $region5
    $region4: #{tpu_custom_call.1} parent=1 // pred_region
      %s21 = ssub.s32 64, 64
      %22 = vsyncadd [#allocation3], %s21
      %s24 = sshll.u32 [#allocation2], 4
      %s25 = int_to_ptr.vmem [resolvable:$true] %s24
      %27 = dma.hbm_to_vmem [thread:$0]  %s0, 64, %s25, [#allocation3]
    $region5: #{tpu_custom_call.1} parent=1 // pred_fallthru
      _
    // Predicated region
    $region6: #{tpu_custom_call.1} parent=1 // pred_check
      _
    $region7: #{tpu_custom_call.1} parent=1 // pred_check_branch
      %29 = sbr.rel (0) target = $region9
    $region8: #{tpu_custom_call.1} parent=1 // pred_region
      %s31 = ssub.s32 16, 16
      %32 = vsyncadd [#allocation5], %s31
      %s34 = sshll.u32 %s1, 4
      %s35 = int_to_ptr.vmem [resolvable:$true] %s34
      %37 = dma.vmem_to_smem %s35, 16, [#allocation6], [#allocation5]
    $region9: #{tpu_custom_call.1} parent=1 // pred_fallthru
      _
    // Predicated region
    $region10: #{tpu_custom_call.1} parent=1 // pred_check
      _
    $region11: #{tpu_custom_call.1} parent=1 // pred_check_branch
      %39 = sbr.rel (0) target = $region13
    $region12: #{tpu_custom_call.1} parent=1 // pred_region
      %s41 = ssub.s32 16, 16
      %42 = vsyncadd [#allocation8], %s41
      %s44 = sshll.u32 %s2, 4
      %s45 = int_to_ptr.vmem [resolvable:$true] %s44
      %47 = dma.vmem_to_smem %s45, 16, [#allocation7], [#allocation8]
    $region13: #{tpu_custom_call.1} parent=1 // pred_fallthru
      _
    // Predicated region
    $region14: #{tpu_custom_call.1} parent=1 // pred_check
      _
    $region15: #{tpu_custom_call.1} parent=1 // pred_check_branch
      %49 = sbr.rel (0) target = $region17
    $region16: #{tpu_custom_call.1} parent=1 // pred_region
      %s51 = ssub.s32 16, 16
      %52 = vsyncadd [#allocation8], %s51
      %s54 = sshll.u32 %s3, 4
      %s55 = int_to_ptr.vmem [resolvable:$true] %s54
      %57 = dma.vmem_to_smem %s55, 16, [#allocation9], [#allocation8]
    $region17: #{tpu_custom_call.1} parent=1 // pred_fallthru
      _
    // Predicated region
    $region18: #{tpu_custom_call.1} parent=1 // pred_check
      _
    $region19: #{tpu_custom_call.1} parent=1 // pred_check_branch
      %59 = sbr.rel (0) target = $region21
    $region20: #{tpu_custom_call.1} parent=1 // pred_region
      %s61 = ssub.s32 16, 16
      %62 = vsyncadd [#allocation11], %s61
      %s64 = sshll.u32 %s4, 4
      %s65 = int_to_ptr.vmem [resolvable:$true] %s64
      %67 = dma.vmem_to_smem %s65, 16, [#allocation10], [#allocation11]
    $region21: #{tpu_custom_call.1} parent=1 // pred_fallthru
      _
    // Predicated region
    $region22: #{tpu_custom_call.1} parent=1 // pred_check
      _
    $region23: #{tpu_custom_call.1} parent=1 // pred_check_branch
      %69 = sbr.rel (0) target = $region25
    $region24: #{tpu_custom_call.1} parent=1 // pred_region
      %s71 = ssub.s32 16, 16
      %72 = vsyncadd [#allocation11], %s71
      %s74 = sshll.u32 %s5, 4
      %s75 = int_to_ptr.vmem [resolvable:$true] %s74
      %77 = dma.vmem_to_smem %s75, 16, [#allocation12], [#allocation11]
    $region25: #{tpu_custom_call.1} parent=1 // pred_fallthru
      _
    // Predicated region
    $region26: #{tpu_custom_call.1} parent=1 // pred_check
      _
    $region27: #{tpu_custom_call.1} parent=1 // pred_check_branch
      %79 = sbr.rel (0) target = $region29
    $region28: #{tpu_custom_call.1} parent=1 // pred_region
      %s81 = ssub.s32 16, 16
      %82 = vsyncadd [#allocation14], %s81
      %s84 = sshll.u32 %s6, 4
      %s85 = int_to_ptr.vmem [resolvable:$true] %s84
      %87 = dma.vmem_to_smem %s85, 16, [#allocation13], [#allocation14]
    $region29: #{tpu_custom_call.1} parent=1 // pred_fallthru
      _
    // Predicated region
    $region30: #{tpu_custom_call.1} parent=1 // pred_check
      _
    $region31: #{tpu_custom_call.1} parent=1 // pred_check_branch
      %89 = sbr.rel (0) target = $region33
    $region32: #{tpu_custom_call.1} parent=1 // pred_region
      %90 = dma.done [#allocation3], 64
    $region33: #{tpu_custom_call.1} parent=1 // pred_fallthru
      _
    // Predicated region
    $region34: #{tpu_custom_call.1} parent=1 // pred_check
      _
    $region35: #{tpu_custom_call.1} parent=1 // pred_check_branch
      %92 = sbr.rel (0) target = $region37
    $region36: #{tpu_custom_call.1} parent=1 // pred_region
      %93 = dma.done [#allocation5], 16
    $region37: #{tpu_custom_call.1} parent=1 // pred_fallthru
      _
    // Predicated region
    $region38: #{tpu_custom_call.1} parent=1 // pred_check
      _
    $region39: #{tpu_custom_call.1} parent=1 // pred_check_branch
      %95 = sbr.rel (0) target = $region41
    $region40: #{tpu_custom_call.1} parent=1 // pred_region
      %96 = dma.done [#allocation8], 16
    $region41: #{tpu_custom_call.1} parent=1 // pred_fallthru
      _
    // Predicated region
    $region42: #{tpu_custom_call.1} parent=1 // pred_check
      _
    $region43: #{tpu_custom_call.1} parent=1 // pred_check_branch
      %98 = sbr.rel (0) target = $region45
    $region44: #{tpu_custom_call.1} parent=1 // pred_region
      %99 = dma.done [#allocation8], 16
    $region45: #{tpu_custom_call.1} parent=1 // pred_fallthru
      _
    // Predicated region
    $region46: #{tpu_custom_call.1} parent=1 // pred_check
      _
    $region47: #{tpu_custom_call.1} parent=1 // pred_check_branch
      %101 = sbr.rel (0) target = $region49
    $region48: #{tpu_custom_call.1} parent=1 // pred_region
      %102 = dma.done [#allocation11], 16
    $region49: #{tpu_custom_call.1} parent=1 // pred_fallthru
      _
    // Predicated region
    $region50: #{tpu_custom_call.1} parent=1 // pred_check
      _
    $region51: #{tpu_custom_call.1} parent=1 // pred_check_branch
      %104 = sbr.rel (0) target = $region53
    $region52: #{tpu_custom_call.1} parent=1 // pred_region
      %105 = dma.done [#allocation11], 16
    $region53: #{tpu_custom_call.1} parent=1 // pred_fallthru
      _
    // Predicated region
    $region54: #{tpu_custom_call.1} parent=1 // pred_check
      _
    $region55: #{tpu_custom_call.1} parent=1 // pred_check_branch
      %107 = sbr.rel (0) target = $region57
    $region56: #{tpu_custom_call.1} parent=1 // pred_region
      %108 = dma.done [#allocation14], 16
    $region57: #{tpu_custom_call.1} parent=1 // pred_fallthru
      _
    %109 = sfence
    %s110 = smul.u32 0, 128
    %s111 = sshra.s32 %s110, 7
    %s112 = sand.u32 %s110, 127
    %s113 = smul.addr %s111, 2
    %s114 = scalar_lea.vmem [#allocation2], %s113
    %v115 = vld [vmem:[%s114] sm:$0xf]
    %v116 = vlaneseq
    %v117 = vand.u32 %v116, 127
    %v118 = vadd.s32 %v117, 128
    %s119 = ssub.s32 %s110, 64
    %v120 = vstv %s119
    %v121 = vadd.s32 %v117, %v120
    %v122 = vadd.s32 %v118, %v120
    %vm123 = vcmp.ge.s32.totalorder %v121, 0
    %vm124 = vcmp.ge.s32.totalorder %v122, 0
    %vm125 = vcmp.lt.s32.totalorder %v121, 128
    %vm126 = vcmp.lt.s32.totalorder %v122, 128
    %vm127 = vmand %vm123, %vm125
    %vm128 = vmand %vm124, %vm126
    %s129 = sld [smem:[#allocation10]]
    %v130 = vstv %s129
    %s131 = sld [smem:[#allocation10 + $0x1]]
    %v132 = vstv %s131
    %s133 = sld [smem:[#allocation10 + $0x2]]
    %v134 = vstv %s133
    %s135 = sld [smem:[#allocation10 + $0x3]]
    %v136 = vstv %s135
    %s137 = sld [smem:[#allocation10 + $0x4]]
    %v138 = vstv %s137
    %s139 = sld [smem:[#allocation10 + $0x5]]
    %v140 = vstv %s139
    %s141 = sld [smem:[#allocation10 + $0x6]]
    %v142 = vstv %s141
    %s143 = sld [smem:[#allocation10 + $0x7]]
    %v144 = vstv %s143
    %s145 = sld [smem:[#allocation10 + $0x8]]
    %v146 = vstv %s145
    %v149 = vunpack.c.l.s4 1983009808
    %v150 = vunpack.c.0.s8 %v149
    %v151 = vlaneseq
    %v152 = vshrl.u32 %v151, 7
    %v153 = vsub.s32 %v150, %v152
    %v154 = vrot.slane %v115, %v153
    %v155 = vcombine.high %v154, %v154
    %158 = vrot.lane.b32.xlu0 %v154, 67
    %v159 = vpop.permute.xlu0 %158
    %160 = vrot.lane.b32.xlu0 %v155, 67
    %v161 = vpop.permute.xlu0 %160
    %vm162 = vcmp.lt.s32.totalorder %v117, 67
    %v163 = vsel %vm162, %v159, %v161
    %s164 = sld [smem:[#allocation6]]
    %v165 = vstv %s164
    %v166 = vmul.f32 %v163, %v165
    %v167 = vadd.f32 %v130, %v166
    %s168 = sld [smem:[#allocation6 + $0x7]]
    %v169 = vstv %s168
    %v170 = vmul.f32 %v163, %v169
    %v171 = vadd.f32 %v132, %v170
    %s172 = sld [smem:[#allocation6 + $0xe]]
    %v173 = vstv %s172
    %v174 = vmul.f32 %v163, %v173
    %v175 = vadd.f32 %v134, %v174
    %s176 = sld [smem:[#allocation6 + $0x15]]
    %v177 = vstv %s176
    %v178 = vmul.f32 %v163, %v177
    %v179 = vadd.f32 %v136, %v178
    %s180 = sld [smem:[#allocation6 + $0x1c]]
    %v181 = vstv %s180
    %v182 = vmul.f32 %v163, %v181
    %v183 = vadd.f32 %v138, %v182
    %s184 = sld [smem:[#allocation6 + $0x23]]
    %v185 = vstv %s184
    %v186 = vmul.f32 %v163, %v185
    %v187 = vadd.f32 %v140, %v186
    %s188 = sld [smem:[#allocation6 + $0x2a]]
    %v189 = vstv %s188
    %v190 = vmul.f32 %v163, %v189
    %v191 = vadd.f32 %v142, %v190
    %s192 = sld [smem:[#allocation6 + $0x31]]
    %v193 = vstv %s192
    %v194 = vmul.f32 %v163, %v193
    %v195 = vadd.f32 %v144, %v194
    %s196 = sld [smem:[#allocation6 + $0x38]]
    %v197 = vstv %s196
    %v198 = vmul.f32 %v163, %v197
    %v199 = vadd.f32 %v146, %v198
    %200 = vrot.lane.b32.xlu0 %v154, 66
    %v201 = vpop.permute.xlu0 %200
    %202 = vrot.lane.b32.xlu0 %v155, 66
    %v203 = vpop.permute.xlu0 %202
    %vm204 = vcmp.lt.s32.totalorder %v117, 66
    %v205 = vsel %vm204, %v201, %v203
    %s206 = sld [smem:[#allocation6 + $0x1]]
    %v207 = vstv %s206
    %v208 = vmul.f32 %v205, %v207
    %v209 = vadd.f32 %v167, %v208
    %s210 = sld [smem:[#allocation6 + $0x8]]
    %v211 = vstv %s210
    %v212 = vmul.f32 %v205, %v211
    %v213 = vadd.f32 %v171, %v212
    %s214 = sld [smem:[#allocation6 + $0xf]]
    %v215 = vstv %s214
    %v216 = vmul.f32 %v205, %v215
    %v217 = vadd.f32 %v175, %v216
    %s218 = sld [smem:[#allocation6 + $0x16]]
    %v219 = vstv %s218
    %v220 = vmul.f32 %v205, %v219
    %v221 = vadd.f32 %v179, %v220
    %s222 = sld [smem:[#allocation6 + $0x1d]]
    %v223 = vstv %s222
    %v224 = vmul.f32 %v205, %v223
    %v225 = vadd.f32 %v183, %v224
    %s226 = sld [smem:[#allocation6 + $0x24]]
    %v227 = vstv %s226
    %v228 = vmul.f32 %v205, %v227
    %v229 = vadd.f32 %v187, %v228
    %s230 = sld [smem:[#allocation6 + $0x2b]]
    %v231 = vstv %s230
    %v232 = vmul.f32 %v205, %v231
    %v233 = vadd.f32 %v191, %v232
    %s234 = sld [smem:[#allocation6 + $0x32]]
    %v235 = vstv %s234
    %v236 = vmul.f32 %v205, %v235
    %v237 = vadd.f32 %v195, %v236
    %s238 = sld [smem:[#allocation6 + $0x39]]
    %v239 = vstv %s238
    %v240 = vmul.f32 %v205, %v239
    %v241 = vadd.f32 %v199, %v240
    %242 = vrot.lane.b32.xlu0 %v154, 65
    %v243 = vpop.permute.xlu0 %242
    %244 = vrot.lane.b32.xlu0 %v155, 65
    %v245 = vpop.permute.xlu0 %244
    %vm246 = vcmp.lt.s32.totalorder %v117, 65
    %v247 = vsel %vm246, %v243, %v245
    %s248 = sld [smem:[#allocation6 + $0x2]]
    %v249 = vstv %s248
    %v250 = vmul.f32 %v247, %v249
    %v251 = vadd.f32 %v209, %v250
    %s252 = sld [smem:[#allocation6 + $0x9]]
    %v253 = vstv %s252
    %v254 = vmul.f32 %v247, %v253
    %v255 = vadd.f32 %v213, %v254
    %s256 = sld [smem:[#allocation6 + $0x10]]
    %v257 = vstv %s256
    %v258 = vmul.f32 %v247, %v257
    %v259 = vadd.f32 %v217, %v258
    %s260 = sld [smem:[#allocation6 + $0x17]]
    %v261 = vstv %s260
    %v262 = vmul.f32 %v247, %v261
    %v263 = vadd.f32 %v221, %v262
    %s264 = sld [smem:[#allocation6 + $0x1e]]
    %v265 = vstv %s264
    %v266 = vmul.f32 %v247, %v265
    %v267 = vadd.f32 %v225, %v266
    %s268 = sld [smem:[#allocation6 + $0x25]]
    %v269 = vstv %s268
    %v270 = vmul.f32 %v247, %v269
    %v271 = vadd.f32 %v229, %v270
    %s272 = sld [smem:[#allocation6 + $0x2c]]
    %v273 = vstv %s272
    %v274 = vmul.f32 %v247, %v273
    %v275 = vadd.f32 %v233, %v274
    %s276 = sld [smem:[#allocation6 + $0x33]]
    %v277 = vstv %s276
    %v278 = vmul.f32 %v247, %v277
    %v279 = vadd.f32 %v237, %v278
    %s280 = sld [smem:[#allocation6 + $0x3a]]
    %v281 = vstv %s280
    %v282 = vmul.f32 %v247, %v281
    %v283 = vadd.f32 %v241, %v282
    %284 = vrot.lane.b32.xlu0 %v154, 64
    %v285 = vpop.permute.xlu0 %284
    %286 = vrot.lane.b32.xlu0 %v155, 64
    %v287 = vpop.permute.xlu0 %286
    %vm288 = vcmp.lt.s32.totalorder %v117, 64
    %v289 = vsel %vm288, %v285, %v287
    %s290 = sld [smem:[#allocation6 + $0x3]]
    %v291 = vstv %s290
    %v292 = vmul.f32 %v289, %v291
    %v293 = vadd.f32 %v251, %v292
    %s294 = sld [smem:[#allocation6 + $0xa]]
    %v295 = vstv %s294
    %v296 = vmul.f32 %v289, %v295
    %v297 = vadd.f32 %v255, %v296
    %s298 = sld [smem:[#allocation6 + $0x11]]
    %v299 = vstv %s298
    %v300 = vmul.f32 %v289, %v299
    %v301 = vadd.f32 %v259, %v300
    %s302 = sld [smem:[#allocation6 + $0x18]]
    %v303 = vstv %s302
    %v304 = vmul.f32 %v289, %v303
    %v305 = vadd.f32 %v263, %v304
    %s306 = sld [smem:[#allocation6 + $0x1f]]
    %v307 = vstv %s306
    %v308 = vmul.f32 %v289, %v307
    %v309 = vadd.f32 %v267, %v308
    %s310 = sld [smem:[#allocation6 + $0x26]]
    %v311 = vstv %s310
    %v312 = vmul.f32 %v289, %v311
    %v313 = vadd.f32 %v271, %v312
    %s314 = sld [smem:[#allocation6 + $0x2d]]
    %v315 = vstv %s314
    %v316 = vmul.f32 %v289, %v315
    %v317 = vadd.f32 %v275, %v316
    %s318 = sld [smem:[#allocation6 + $0x34]]
    %v319 = vstv %s318
    %v320 = vmul.f32 %v289, %v319
    %v321 = vadd.f32 %v279, %v320
    %s322 = sld [smem:[#allocation6 + $0x3b]]
    %v323 = vstv %s322
    %v324 = vmul.f32 %v289, %v323
    %v325 = vadd.f32 %v283, %v324
    %326 = vrot.lane.b32.xlu0 %v154, 63
    %v327 = vpop.permute.xlu0 %326
    %328 = vrot.lane.b32.xlu0 %v155, 63
    %v329 = vpop.permute.xlu0 %328
    %vm330 = vcmp.lt.s32.totalorder %v117, 63
    %v331 = vsel %vm330, %v327, %v329
    %s332 = sld [smem:[#allocation6 + $0x4]]
    %v333 = vstv %s332
    %v334 = vmul.f32 %v331, %v333
    %v335 = vadd.f32 %v293, %v334
    %s336 = sld [smem:[#allocation6 + $0xb]]
    %v337 = vstv %s336
    %v338 = vmul.f32 %v331, %v337
    %v339 = vadd.f32 %v297, %v338
    %s340 = sld [smem:[#allocation6 + $0x12]]
    %v341 = vstv %s340
    %v342 = vmul.f32 %v331, %v341
    %v343 = vadd.f32 %v301, %v342
    %s344 = sld [smem:[#allocation6 + $0x19]]
    %v345 = vstv %s344
    %v346 = vmul.f32 %v331, %v345
    %v347 = vadd.f32 %v305, %v346
    %s348 = sld [smem:[#allocation6 + $0x20]]
    %v349 = vstv %s348
    %v350 = vmul.f32 %v331, %v349
    %v351 = vadd.f32 %v309, %v350
    %s352 = sld [smem:[#allocation6 + $0x27]]
    %v353 = vstv %s352
    %v354 = vmul.f32 %v331, %v353
    %v355 = vadd.f32 %v313, %v354
    %s356 = sld [smem:[#allocation6 + $0x2e]]
    %v357 = vstv %s356
    %v358 = vmul.f32 %v331, %v357
    %v359 = vadd.f32 %v317, %v358
    %s360 = sld [smem:[#allocation6 + $0x35]]
    %v361 = vstv %s360
    %v362 = vmul.f32 %v331, %v361
    %v363 = vadd.f32 %v321, %v362
    %s364 = sld [smem:[#allocation6 + $0x3c]]
    %v365 = vstv %s364
    %v366 = vmul.f32 %v331, %v365
    %v367 = vadd.f32 %v325, %v366
    %368 = vrot.lane.b32.xlu0 %v154, 62
    %v369 = vpop.permute.xlu0 %368
    %370 = vrot.lane.b32.xlu0 %v155, 62
    %v371 = vpop.permute.xlu0 %370
    %vm372 = vcmp.lt.s32.totalorder %v117, 62
    %v373 = vsel %vm372, %v369, %v371
    %s374 = sld [smem:[#allocation6 + $0x5]]
    %v375 = vstv %s374
    %v376 = vmul.f32 %v373, %v375
    %v377 = vadd.f32 %v335, %v376
    %s378 = sld [smem:[#allocation6 + $0xc]]
    %v379 = vstv %s378
    %v380 = vmul.f32 %v373, %v379
    %v381 = vadd.f32 %v339, %v380
    %s382 = sld [smem:[#allocation6 + $0x13]]
    %v383 = vstv %s382
    %v384 = vmul.f32 %v373, %v383
    %v385 = vadd.f32 %v343, %v384
    %s386 = sld [smem:[#allocation6 + $0x1a]]
    %v387 = vstv %s386
    %v388 = vmul.f32 %v373, %v387
    %v389 = vadd.f32 %v347, %v388
    %s390 = sld [smem:[#allocation6 + $0x21]]
    %v391 = vstv %s390
    %v392 = vmul.f32 %v373, %v391
    %v393 = vadd.f32 %v351, %v392
    %s394 = sld [smem:[#allocation6 + $0x28]]
    %v395 = vstv %s394
    %v396 = vmul.f32 %v373, %v395
    %v397 = vadd.f32 %v355, %v396
    %s398 = sld [smem:[#allocation6 + $0x2f]]
    %v399 = vstv %s398
    %v400 = vmul.f32 %v373, %v399
    %v401 = vadd.f32 %v359, %v400
    %s402 = sld [smem:[#allocation6 + $0x36]]
    %v403 = vstv %s402
    %v404 = vmul.f32 %v373, %v403
    %v405 = vadd.f32 %v363, %v404
    %s406 = sld [smem:[#allocation6 + $0x3d]]
    %v407 = vstv %s406
    %v408 = vmul.f32 %v373, %v407
    %v409 = vadd.f32 %v367, %v408
    %410 = vrot.lane.b32.xlu0 %v154, 61
    %v411 = vpop.permute.xlu0 %410
    %412 = vrot.lane.b32.xlu0 %v155, 61
    %v413 = vpop.permute.xlu0 %412
    %vm414 = vcmp.lt.s32.totalorder %v117, 61
    %v415 = vsel %vm414, %v411, %v413
    %s416 = sld [smem:[#allocation6 + $0x6]]
    %v417 = vstv %s416
    %v418 = vmul.f32 %v415, %v417
    %v419 = vadd.f32 %v377, %v418
    %s420 = sld [smem:[#allocation6 + $0xd]]
    %v421 = vstv %s420
    %v422 = vmul.f32 %v415, %v421
    %v423 = vadd.f32 %v381, %v422
    %s424 = sld [smem:[#allocation6 + $0x14]]
    %v425 = vstv %s424
    %v426 = vmul.f32 %v415, %v425
    %v427 = vadd.f32 %v385, %v426
    %s428 = sld [smem:[#allocation6 + $0x1b]]
    %v429 = vstv %s428
    %v430 = vmul.f32 %v415, %v429
    %v431 = vadd.f32 %v389, %v430
    %s432 = sld [smem:[#allocation6 + $0x22]]
    %v433 = vstv %s432
    %v434 = vmul.f32 %v415, %v433
    %v435 = vadd.f32 %v393, %v434
    %s436 = sld [smem:[#allocation6 + $0x29]]
    %v437 = vstv %s436
    %v438 = vmul.f32 %v415, %v437
    %v439 = vadd.f32 %v397, %v438
    %s440 = sld [smem:[#allocation6 + $0x30]]
    %v441 = vstv %s440
    %v442 = vmul.f32 %v415, %v441
    %v443 = vadd.f32 %v401, %v442
    %s444 = sld [smem:[#allocation6 + $0x37]]
    %v445 = vstv %s444
    %v446 = vmul.f32 %v415, %v445
    %v447 = vadd.f32 %v405, %v446
    %s448 = sld [smem:[#allocation6 + $0x3e]]
    %v449 = vstv %s448
    %v450 = vmul.f32 %v415, %v449
    %v451 = vadd.f32 %v409, %v450
    %v454 = vunpack.c.l.s4 1966171168
    %v455 = vunpack.c.0.s8 %v454
    %v456 = vlaneseq
    %v457 = vshrl.u32 %v456, 7
    %v458 = vsub.s32 %v455, %v457
    %v459 = vrot.slane %v419, %v458
    %v460 = vcombine.high %v459, %v459
    %v462 = vunpack.c.l.s4 1966171168
    %v463 = vunpack.c.0.s8 %v462
    %v464 = vlaneseq
    %v465 = vshrl.u32 %v464, 7
    %v466 = vsub.s32 %v463, %v465
    %v467 = vrot.slane %v459, %v466
    %v469 = vunpack.c.l.s4 1966171168
    %v470 = vunpack.c.0.s8 %v469
    %v471 = vlaneseq
    %v472 = vshrl.u32 %v471, 7
    %v473 = vsub.s32 %v470, %v472
    %v474 = vrot.slane %v460, %v473
    %v479 = vunpack.c.l.s4 1966171168
    %v480 = vunpack.c.0.s8 %v479
    %v481 = vlaneseq
    %v482 = vshrl.u32 %v481, 7
    %v483 = vsub.s32 %v480, %v482
    %v484 = vrot.slane %v423, %v483
    %v485 = vcombine.high %v484, %v484
    %v487 = vunpack.c.l.s4 1966171168
    %v488 = vunpack.c.0.s8 %v487
    %v489 = vlaneseq
    %v490 = vshrl.u32 %v489, 7
    %v491 = vsub.s32 %v488, %v490
    %v492 = vrot.slane %v484, %v491
    %v494 = vunpack.c.l.s4 1966171168
    %v495 = vunpack.c.0.s8 %v494
    %v496 = vlaneseq
    %v497 = vshrl.u32 %v496, 7
    %v498 = vsub.s32 %v495, %v497
    %v499 = vrot.slane %v485, %v498
    %v502 = vunpack.c.l.s4 1966171168
    %v503 = vunpack.c.0.s8 %v502
    %v504 = vlaneseq
    %v505 = vshrl.u32 %v504, 7
    %v506 = vsub.s32 %v503, %v505
    %v507 = vrot.slane %v427, %v506
    %v508 = vcombine.high %v507, %v507
    %v510 = vunpack.c.l.s4 1966171168
    %v511 = vunpack.c.0.s8 %v510
    %v512 = vlaneseq
    %v513 = vshrl.u32 %v512, 7
    %v514 = vsub.s32 %v511, %v513
    %v515 = vrot.slane %v507, %v514
    %v517 = vunpack.c.l.s4 1966171168
    %v518 = vunpack.c.0.s8 %v517
    %v519 = vlaneseq
    %v520 = vshrl.u32 %v519, 7
    %v521 = vsub.s32 %v518, %v520
    %v522 = vrot.slane %v508, %v521
    %v525 = vunpack.c.l.s4 1966171168
    %v526 = vunpack.c.0.s8 %v525
    %v527 = vlaneseq
    %v528 = vshrl.u32 %v527, 7
    %v529 = vsub.s32 %v526, %v528
    %v530 = vrot.slane %v431, %v529
    %v531 = vcombine.high %v530, %v530
    %v533 = vunpack.c.l.s4 1966171168
    %v534 = vunpack.c.0.s8 %v533
    %v535 = vlaneseq
    %v536 = vshrl.u32 %v535, 7
    %v537 = vsub.s32 %v534, %v536
    %v538 = vrot.slane %v530, %v537
    %v540 = vunpack.c.l.s4 1966171168
    %v541 = vunpack.c.0.s8 %v540
    %v542 = vlaneseq
    %v543 = vshrl.u32 %v542, 7
    %v544 = vsub.s32 %v541, %v543
    %v545 = vrot.slane %v531, %v544
    %v548 = vunpack.c.l.s4 1966171168
    %v549 = vunpack.c.0.s8 %v548
    %v550 = vlaneseq
    %v551 = vshrl.u32 %v550, 7
    %v552 = vsub.s32 %v549, %v551
    %v553 = vrot.slane %v435, %v552
    %v554 = vcombine.high %v553, %v553
    %v556 = vunpack.c.l.s4 1966171168
    %v557 = vunpack.c.0.s8 %v556
    %v558 = vlaneseq
    %v559 = vshrl.u32 %v558, 7
    %v560 = vsub.s32 %v557, %v559
    %v561 = vrot.slane %v553, %v560
    %v563 = vunpack.c.l.s4 1966171168
    %v564 = vunpack.c.0.s8 %v563
    %v565 = vlaneseq
    %v566 = vshrl.u32 %v565, 7
    %v567 = vsub.s32 %v564, %v566
    %v568 = vrot.slane %v554, %v567
    %v571 = vunpack.c.l.s4 1966171168
    %v572 = vunpack.c.0.s8 %v571
    %v573 = vlaneseq
    %v574 = vshrl.u32 %v573, 7
    %v575 = vsub.s32 %v572, %v574
    %v576 = vrot.slane %v439, %v575
    %v577 = vcombine.high %v576, %v576
    %v579 = vunpack.c.l.s4 1966171168
    %v580 = vunpack.c.0.s8 %v579
    %v581 = vlaneseq
    %v582 = vshrl.u32 %v581, 7
    %v583 = vsub.s32 %v580, %v582
    %v584 = vrot.slane %v576, %v583
    %v586 = vunpack.c.l.s4 1966171168
    %v587 = vunpack.c.0.s8 %v586
    %v588 = vlaneseq
    %v589 = vshrl.u32 %v588, 7
    %v590 = vsub.s32 %v587, %v589
    %v591 = vrot.slane %v577, %v590
    %v594 = vunpack.c.l.s4 1966171168
    %v595 = vunpack.c.0.s8 %v594
    %v596 = vlaneseq
    %v597 = vshrl.u32 %v596, 7
    %v598 = vsub.s32 %v595, %v597
    %v599 = vrot.slane %v443, %v598
    %v600 = vcombine.high %v599, %v599
    %v602 = vunpack.c.l.s4 1966171168
    %v603 = vunpack.c.0.s8 %v602
    %v604 = vlaneseq
    %v605 = vshrl.u32 %v604, 7
    %v606 = vsub.s32 %v603, %v605
    %v607 = vrot.slane %v599, %v606
    %v609 = vunpack.c.l.s4 1966171168
    %v610 = vunpack.c.0.s8 %v609
    %v611 = vlaneseq
    %v612 = vshrl.u32 %v611, 7
    %v613 = vsub.s32 %v610, %v612
    %v614 = vrot.slane %v600, %v613
    %v617 = vunpack.c.l.s4 1966171168
    %v618 = vunpack.c.0.s8 %v617
    %v619 = vlaneseq
    %v620 = vshrl.u32 %v619, 7
    %v621 = vsub.s32 %v618, %v620
    %v622 = vrot.slane %v447, %v621
    %v623 = vcombine.high %v622, %v622
    %v625 = vunpack.c.l.s4 1966171168
    %v626 = vunpack.c.0.s8 %v625
    %v627 = vlaneseq
    %v628 = vshrl.u32 %v627, 7
    %v629 = vsub.s32 %v626, %v628
    %v630 = vrot.slane %v622, %v629
    %v632 = vunpack.c.l.s4 1966171168
    %v633 = vunpack.c.0.s8 %v632
    %v634 = vlaneseq
    %v635 = vshrl.u32 %v634, 7
    %v636 = vsub.s32 %v633, %v635
    %v637 = vrot.slane %v623, %v636
    %v640 = vunpack.c.l.s4 1966171168
    %v641 = vunpack.c.0.s8 %v640
    %v642 = vlaneseq
    %v643 = vshrl.u32 %v642, 7
    %v644 = vsub.s32 %v641, %v643
    %v645 = vrot.slane %v451, %v644
    %v646 = vcombine.high %v645, %v645
    %v648 = vunpack.c.l.s4 1966171168
    %v649 = vunpack.c.0.s8 %v648
    %v650 = vlaneseq
    %v651 = vshrl.u32 %v650, 7
    %v652 = vsub.s32 %v649, %v651
    %v653 = vrot.slane %v645, %v652
    %v655 = vunpack.c.l.s4 1966171168
    %v656 = vunpack.c.0.s8 %v655
    %v657 = vlaneseq
    %v658 = vshrl.u32 %v657, 7
    %v659 = vsub.s32 %v656, %v658
    %v660 = vrot.slane %v646, %v659
    %v663 = vlaneseq
    %v664 = vshrl.u32 %v663, 7
    %v665 = vsub.s32 0, %v664
    %v666 = vrot.slane %v492, %v665
    %v667 = vlaneseq
    %v668 = vshrl.u32 %v667, 7
    %v669 = vsub.s32 0, %v668
    %v670 = vrot.slane %v499, %v669
    %v673 = vlaneseq
    %v674 = vshrl.u32 %v673, 7
    %v675 = vsub.s32 0, %v674
    %v676 = vrot.slane %v515, %v675
    %v677 = vlaneseq
    %v678 = vshrl.u32 %v677, 7
    %v679 = vsub.s32 0, %v678
    %v680 = vrot.slane %v522, %v679
    %v683 = vlaneseq
    %v684 = vshrl.u32 %v683, 7
    %v685 = vsub.s32 0, %v684
    %v686 = vrot.slane %v538, %v685
    %v687 = vlaneseq
    %v688 = vshrl.u32 %v687, 7
    %v689 = vsub.s32 0, %v688
    %v690 = vrot.slane %v545, %v689
    %v693 = vlaneseq
    %v694 = vshrl.u32 %v693, 7
    %v695 = vsub.s32 0, %v694
    %v696 = vrot.slane %v561, %v695
    %v697 = vlaneseq
    %v698 = vshrl.u32 %v697, 7
    %v699 = vsub.s32 0, %v698
    %v700 = vrot.slane %v568, %v699
    %v703 = vlaneseq
    %v704 = vshrl.u32 %v703, 7
    %v705 = vsub.s32 0, %v704
    %v706 = vrot.slane %v584, %v705
    %v707 = vlaneseq
    %v708 = vshrl.u32 %v707, 7
    %v709 = vsub.s32 0, %v708
    %v710 = vrot.slane %v591, %v709
    %v713 = vlaneseq
    %v714 = vshrl.u32 %v713, 7
    %v715 = vsub.s32 0, %v714
    %v716 = vrot.slane %v607, %v715
    %v717 = vlaneseq
    %v718 = vshrl.u32 %v717, 7
    %v719 = vsub.s32 0, %v718
    %v720 = vrot.slane %v614, %v719
    %v723 = vlaneseq
    %v724 = vshrl.u32 %v723, 7
    %v725 = vsub.s32 0, %v724
    %v726 = vrot.slane %v630, %v725
    %v727 = vlaneseq
    %v728 = vshrl.u32 %v727, 7
    %v729 = vsub.s32 0, %v728
    %v730 = vrot.slane %v637, %v729
    %vm733 = vcmask 1040384
    %v734 = vsel %vm733, %v467, %v666
    %v735 = vsel %vm733, %v474, %v670
    %vm736 = vcmask 1041408
    %v737 = vsel %vm736, %v734, %v676
    %v738 = vsel %vm736, %v735, %v680
    %vm739 = vcmask 1042432
    %v740 = vsel %vm739, %v737, %v686
    %v741 = vsel %vm739, %v738, %v690
    %vm742 = vcmask 1043456
    %v743 = vsel %vm742, %v740, %v696
    %v744 = vsel %vm742, %v741, %v700
    %vm745 = vcmask 1044480
    %v746 = vsel %vm745, %v743, %v706
    %v747 = vsel %vm745, %v744, %v710
    %vm748 = vcmask 1045504
    %v749 = vsel %vm748, %v746, %v716
    %v750 = vsel %vm748, %v747, %v720
    %vm751 = vcmask 1046528
    %v752 = vsel %vm751, %v749, %v726
    %v753 = vsel %vm751, %v750, %v730
    %754 = vst [vmem:[#allocation15] sm:$0xff] %v752
    %755 = vst [vmem:[#allocation15 + $0x8] sm:$0x1] %v653
    %756 = vst [vmem:[#allocation15 + $0x10] sm:$0xff] %v753
    %757 = vst [vmem:[#allocation15 + $0x18] sm:$0x1] %v660
    %v758 = vsel %vm127, %v154, -inf
    %v759 = vsel %vm128, %v155, -inf
    %760 = vrot.lane.b32.xlu0 %v758, 127
    %v761 = vpop.permute.xlu0 %760
    %762 = vrot.lane.b32.xlu0 %v759, 127
    %v763 = vpop.permute.xlu0 %762
    %vm764 = vcmp.lt.s32.totalorder %v117, 127
    %v765 = vsel %vm764, %v761, %v763
    %v766 = vsel %vm764, %v763, %v761
    %v767 = vmax.f32 %v758, %v765
    %v768 = vmax.f32 %v759, %v766
    %769 = vrot.lane.b32.xlu0 %v758, 126
    %v770 = vpop.permute.xlu0 %769
    %771 = vrot.lane.b32.xlu0 %v759, 126
    %v772 = vpop.permute.xlu0 %771
    %vm773 = vcmp.lt.s32.totalorder %v117, 126
    %v774 = vsel %vm773, %v770, %v772
    %v775 = vsel %vm773, %v772, %v770
    %v776 = vmax.f32 %v767, %v774
    %v777 = vmax.f32 %v768, %v775
    %778 = vrot.lane.b32.xlu0 %v776, 1
    %v779 = vpop.permute.xlu0 %778
    %780 = vrot.lane.b32.xlu0 %v777, 1
    %v781 = vpop.permute.xlu0 %780
    %vm782 = vcmp.lt.s32.totalorder %v117, 1
    %v783 = vsel %vm782, %v779, %v781
    %v784 = vsel %vm782, %v781, %v779
    %v785 = vsel %vm127, %v784, 0.0
    %v786 = vsel %vm128, %v783, 0.0
    %787 = vrot.lane.b32.xlu0 %v785, 127
    %v788 = vpop.permute.xlu0 %787
    %789 = vrot.lane.b32.xlu0 %v786, 127
    %v790 = vpop.permute.xlu0 %789
    %v791 = vsel %vm764, %v788, %v790
    %v792 = vsel %vm764, %v790, %v788
    %v793 = vadd.f32 %v785, %v791
    %v794 = vadd.f32 %v786, %v792
    %795 = vrot.lane.b32.xlu0 %v785, 126
    %v796 = vpop.permute.xlu0 %795
    %797 = vrot.lane.b32.xlu0 %v786, 126
    %v798 = vpop.permute.xlu0 %797
    %v799 = vsel %vm773, %v796, %v798
    %v800 = vsel %vm773, %v798, %v796
    %v801 = vadd.f32 %v793, %v799
    %v802 = vadd.f32 %v794, %v800
    %803 = vrot.lane.b32.xlu0 %v801, 1
    %v804 = vpop.permute.xlu0 %803
    %805 = vrot.lane.b32.xlu0 %v802, 1
    %v806 = vpop.permute.xlu0 %805
    %v807 = vsel %vm782, %v804, %v806
    %v808 = vsel %vm782, %v806, %v804
    %v809 = vmul.f32 %v808, 0.33333334
    %v810 = vmul.f32 %v807, 0.33333334
    %v811 = vsel %vm127, %v809, 0.0
    %v812 = vsel %vm128, %v810, 0.0
    %s813 = sld [smem:[#allocation12]]
    %v814 = vstv %s813
    %s815 = sld [smem:[#allocation12 + $0x1]]
    %v816 = vstv %s815
    %s817 = sld [smem:[#allocation12 + $0x2]]
    %v818 = vstv %s817
    %s819 = sld [smem:[#allocation12 + $0x3]]
    %v820 = vstv %s819
    %821 = vrot.lane.b32.xlu0 %v811, 73
    %v822 = vpop.permute.xlu0 %821
    %823 = vrot.lane.b32.xlu0 %v812, 73
    %v824 = vpop.permute.xlu0 %823
    %vm825 = vcmp.lt.s32.totalorder %v117, 73
    %v826 = vsel %vm825, %v822, %v824
    %s827 = sld [smem:[#allocation7]]
    %v828 = vstv %s827
    %v829 = vmul.f32 %v826, %v828
    %v830 = vadd.f32 %v814, %v829
    %s831 = sld [smem:[#allocation7 + $0x7]]
    %v832 = vstv %s831
    %v833 = vmul.f32 %v826, %v832
    %v834 = vadd.f32 %v816, %v833
    %s835 = sld [smem:[#allocation7 + $0xe]]
    %v836 = vstv %s835
    %v837 = vmul.f32 %v826, %v836
    %v838 = vadd.f32 %v818, %v837
    %s839 = sld [smem:[#allocation7 + $0x15]]
    %v840 = vstv %s839
    %v841 = vmul.f32 %v826, %v840
    %v842 = vadd.f32 %v820, %v841
    %843 = vrot.lane.b32.xlu0 %v811, 70
    %v844 = vpop.permute.xlu0 %843
    %845 = vrot.lane.b32.xlu0 %v812, 70
    %v846 = vpop.permute.xlu0 %845
    %vm847 = vcmp.lt.s32.totalorder %v117, 70
    %v848 = vsel %vm847, %v844, %v846
    %s849 = sld [smem:[#allocation7 + $0x1]]
    %v850 = vstv %s849
    %v851 = vmul.f32 %v848, %v850
    %v852 = vadd.f32 %v830, %v851
    %s853 = sld [smem:[#allocation7 + $0x8]]
    %v854 = vstv %s853
    %v855 = vmul.f32 %v848, %v854
    %v856 = vadd.f32 %v834, %v855
    %s857 = sld [smem:[#allocation7 + $0xf]]
    %v858 = vstv %s857
    %v859 = vmul.f32 %v848, %v858
    %v860 = vadd.f32 %v838, %v859
    %s861 = sld [smem:[#allocation7 + $0x16]]
    %v862 = vstv %s861
    %v863 = vmul.f32 %v848, %v862
    %v864 = vadd.f32 %v842, %v863
    %865 = vrot.lane.b32.xlu0 %v811, 67
    %v866 = vpop.permute.xlu0 %865
    %867 = vrot.lane.b32.xlu0 %v812, 67
    %v868 = vpop.permute.xlu0 %867
    %v869 = vsel %vm162, %v866, %v868
    %s870 = sld [smem:[#allocation7 + $0x2]]
    %v871 = vstv %s870
    %v872 = vmul.f32 %v869, %v871
    %v873 = vadd.f32 %v852, %v872
    %s874 = sld [smem:[#allocation7 + $0x9]]
    %v875 = vstv %s874
    %v876 = vmul.f32 %v869, %v875
    %v877 = vadd.f32 %v856, %v876
    %s878 = sld [smem:[#allocation7 + $0x10]]
    %v879 = vstv %s878
    %v880 = vmul.f32 %v869, %v879
    %v881 = vadd.f32 %v860, %v880
    %s882 = sld [smem:[#allocation7 + $0x17]]
    %v883 = vstv %s882
    %v884 = vmul.f32 %v869, %v883
    %v885 = vadd.f32 %v864, %v884
    %886 = vrot.lane.b32.xlu0 %v811, 64
    %v887 = vpop.permute.xlu0 %886
    %888 = vrot.lane.b32.xlu0 %v812, 64
    %v889 = vpop.permute.xlu0 %888
    %v890 = vsel %vm288, %v887, %v889
    %s891 = sld [smem:[#allocation7 + $0x3]]
    %v892 = vstv %s891
    %v893 = vmul.f32 %v890, %v892
    %v894 = vadd.f32 %v873, %v893
    %s895 = sld [smem:[#allocation7 + $0xa]]
    %v896 = vstv %s895
    %v897 = vmul.f32 %v890, %v896
    %v898 = vadd.f32 %v877, %v897
    %s899 = sld [smem:[#allocation7 + $0x11]]
    %v900 = vstv %s899
    %v901 = vmul.f32 %v890, %v900
    %v902 = vadd.f32 %v881, %v901
    %s903 = sld [smem:[#allocation7 + $0x18]]
    %v904 = vstv %s903
    %v905 = vmul.f32 %v890, %v904
    %v906 = vadd.f32 %v885, %v905
    %907 = vrot.lane.b32.xlu0 %v811, 61
    %v908 = vpop.permute.xlu0 %907
    %909 = vrot.lane.b32.xlu0 %v812, 61
    %v910 = vpop.permute.xlu0 %909
    %v911 = vsel %vm414, %v908, %v910
    %s912 = sld [smem:[#allocation7 + $0x4]]
    %v913 = vstv %s912
    %v914 = vmul.f32 %v911, %v913
    %v915 = vadd.f32 %v894, %v914
    %s916 = sld [smem:[#allocation7 + $0xb]]
    %v917 = vstv %s916
    %v918 = vmul.f32 %v911, %v917
    %v919 = vadd.f32 %v898, %v918
    %s920 = sld [smem:[#allocation7 + $0x12]]
    %v921 = vstv %s920
    %v922 = vmul.f32 %v911, %v921
    %v923 = vadd.f32 %v902, %v922
    %s924 = sld [smem:[#allocation7 + $0x19]]
    %v925 = vstv %s924
    %v926 = vmul.f32 %v911, %v925
    %v927 = vadd.f32 %v906, %v926
    %928 = vrot.lane.b32.xlu0 %v811, 58
    %v929 = vpop.permute.xlu0 %928
    %930 = vrot.lane.b32.xlu0 %v812, 58
    %v931 = vpop.permute.xlu0 %930
    %vm932 = vcmp.lt.s32.totalorder %v117, 58
    %v933 = vsel %vm932, %v929, %v931
    %s934 = sld [smem:[#allocation7 + $0x5]]
    %v935 = vstv %s934
    %v936 = vmul.f32 %v933, %v935
    %v937 = vadd.f32 %v915, %v936
    %s938 = sld [smem:[#allocation7 + $0xc]]
    %v939 = vstv %s938
    %v940 = vmul.f32 %v933, %v939
    %v941 = vadd.f32 %v919, %v940
    %s942 = sld [smem:[#allocation7 + $0x13]]
    %v943 = vstv %s942
    %v944 = vmul.f32 %v933, %v943
    %v945 = vadd.f32 %v923, %v944
    %s946 = sld [smem:[#allocation7 + $0x1a]]
    %v947 = vstv %s946
    %v948 = vmul.f32 %v933, %v947
    %v949 = vadd.f32 %v927, %v948
    %950 = vrot.lane.b32.xlu0 %v811, 55
    %v951 = vpop.permute.xlu0 %950
    %952 = vrot.lane.b32.xlu0 %v812, 55
    %v953 = vpop.permute.xlu0 %952
    %vm954 = vcmp.lt.s32.totalorder %v117, 55
    %v955 = vsel %vm954, %v951, %v953
    %s956 = sld [smem:[#allocation7 + $0x6]]
    %v957 = vstv %s956
    %v958 = vmul.f32 %v955, %v957
    %v959 = vadd.f32 %v937, %v958
    %s960 = sld [smem:[#allocation7 + $0xd]]
    %v961 = vstv %s960
    %v962 = vmul.f32 %v955, %v961
    %v963 = vadd.f32 %v941, %v962
    %s964 = sld [smem:[#allocation7 + $0x14]]
    %v965 = vstv %s964
    %v966 = vmul.f32 %v955, %v965
    %v967 = vadd.f32 %v945, %v966
    %s968 = sld [smem:[#allocation7 + $0x1b]]
    %v969 = vstv %s968
    %v970 = vmul.f32 %v955, %v969
    %v971 = vadd.f32 %v949, %v970
    %v974 = vunpack.c.l.s4 1966171168
    %v975 = vunpack.c.0.s8 %v974
    %v976 = vlaneseq
    %v977 = vshrl.u32 %v976, 7
    %v978 = vsub.s32 %v975, %v977
    %v979 = vrot.slane %v959, %v978
    %v980 = vcombine.high %v979, %v979
    %v982 = vunpack.c.l.s4 1966171168
    %v983 = vunpack.c.0.s8 %v982
    %v984 = vlaneseq
    %v985 = vshrl.u32 %v984, 7
    %v986 = vsub.s32 %v983, %v985
    %v987 = vrot.slane %v979, %v986
    %v989 = vunpack.c.l.s4 1966171168
    %v990 = vunpack.c.0.s8 %v989
    %v991 = vlaneseq
    %v992 = vshrl.u32 %v991, 7
    %v993 = vsub.s32 %v990, %v992
    %v994 = vrot.slane %v980, %v993
    %v999 = vunpack.c.l.s4 1966171168
    %v1000 = vunpack.c.0.s8 %v999
    %v1001 = vlaneseq
    %v1002 = vshrl.u32 %v1001, 7
    %v1003 = vsub.s32 %v1000, %v1002
    %v1004 = vrot.slane %v963, %v1003
    %v1005 = vcombine.high %v1004, %v1004
    %v1007 = vunpack.c.l.s4 1966171168
    %v1008 = vunpack.c.0.s8 %v1007
    %v1009 = vlaneseq
    %v1010 = vshrl.u32 %v1009, 7
    %v1011 = vsub.s32 %v1008, %v1010
    %v1012 = vrot.slane %v1004, %v1011
    %v1014 = vunpack.c.l.s4 1966171168
    %v1015 = vunpack.c.0.s8 %v1014
    %v1016 = vlaneseq
    %v1017 = vshrl.u32 %v1016, 7
    %v1018 = vsub.s32 %v1015, %v1017
    %v1019 = vrot.slane %v1005, %v1018
    %v1022 = vunpack.c.l.s4 1966171168
    %v1023 = vunpack.c.0.s8 %v1022
    %v1024 = vlaneseq
    %v1025 = vshrl.u32 %v1024, 7
    %v1026 = vsub.s32 %v1023, %v1025
    %v1027 = vrot.slane %v967, %v1026
    %v1028 = vcombine.high %v1027, %v1027
    %v1030 = vunpack.c.l.s4 1966171168
    %v1031 = vunpack.c.0.s8 %v1030
    %v1032 = vlaneseq
    %v1033 = vshrl.u32 %v1032, 7
    %v1034 = vsub.s32 %v1031, %v1033
    %v1035 = vrot.slane %v1027, %v1034
    %v1037 = vunpack.c.l.s4 1966171168
    %v1038 = vunpack.c.0.s8 %v1037
    %v1039 = vlaneseq
    %v1040 = vshrl.u32 %v1039, 7
    %v1041 = vsub.s32 %v1038, %v1040
    %v1042 = vrot.slane %v1028, %v1041
    %v1045 = vunpack.c.l.s4 1966171168
    %v1046 = vunpack.c.0.s8 %v1045
    %v1047 = vlaneseq
    %v1048 = vshrl.u32 %v1047, 7
    %v1049 = vsub.s32 %v1046, %v1048
    %v1050 = vrot.slane %v971, %v1049
    %v1051 = vcombine.high %v1050, %v1050
    %v1053 = vunpack.c.l.s4 1966171168
    %v1054 = vunpack.c.0.s8 %v1053
    %v1055 = vlaneseq
    %v1056 = vshrl.u32 %v1055, 7
    %v1057 = vsub.s32 %v1054, %v1056
    %v1058 = vrot.slane %v1050, %v1057
    %v1060 = vunpack.c.l.s4 1966171168
    %v1061 = vunpack.c.0.s8 %v1060
    %v1062 = vlaneseq
    %v1063 = vshrl.u32 %v1062, 7
    %v1064 = vsub.s32 %v1061, %v1063
    %v1065 = vrot.slane %v1051, %v1064
    %v1066 = vlaneseq
    %v1067 = vshrl.u32 %v1066, 7
    %v1068 = vsub.s32 0, %v1067
    %v1069 = vrot.slane %v1012, %v1068
    %v1070 = vlaneseq
    %v1071 = vshrl.u32 %v1070, 7
    %v1072 = vsub.s32 0, %v1071
    %v1073 = vrot.slane %v1019, %v1072
    %v1076 = vlaneseq
    %v1077 = vshrl.u32 %v1076, 7
    %v1078 = vsub.s32 0, %v1077
    %v1079 = vrot.slane %v1035, %v1078
    %v1080 = vlaneseq
    %v1081 = vshrl.u32 %v1080, 7
    %v1082 = vsub.s32 0, %v1081
    %v1083 = vrot.slane %v1042, %v1082
    %v1086 = vlaneseq
    %v1087 = vshrl.u32 %v1086, 7
    %v1088 = vsub.s32 0, %v1087
    %v1089 = vrot.slane %v1058, %v1088
    %v1090 = vlaneseq
    %v1091 = vshrl.u32 %v1090, 7
    %v1092 = vsub.s32 0, %v1091
    %v1093 = vrot.slane %v1065, %v1092
    %v1096 = vsel %vm733, %v987, %v1069
    %v1097 = vsel %vm733, %v994, %v1073
    %v1098 = vsel %vm736, %v1096, %v1079
    %v1099 = vsel %vm736, %v1097, %v1083
    %v1100 = vsel %vm739, %v1098, %v1089
    %v1101 = vsel %vm739, %v1099, %v1093
    %1102 = vst [vmem:[#allocation15 + $0x9] sm:$0xf] %v1100
    %1103 = vst [vmem:[#allocation15 + $0x19] sm:$0xf] %v1101
    %1104 = vrot.lane.b32.xlu0 %v767, 126
    %v1105 = vpop.permute.xlu0 %1104
    %1106 = vrot.lane.b32.xlu0 %v768, 126
    %v1107 = vpop.permute.xlu0 %1106
    %v1108 = vsel %vm773, %v1105, %v1107
    %v1109 = vsel %vm773, %v1107, %v1105
    %v1110 = vmax.f32 %v767, %v1108
    %v1111 = vmax.f32 %v768, %v1109
    %1112 = vrot.lane.b32.xlu0 %v1110, 124
    %v1113 = vpop.permute.xlu0 %1112
    %1114 = vrot.lane.b32.xlu0 %v1111, 124
    %v1115 = vpop.permute.xlu0 %1114
    %vm1116 = vcmp.lt.s32.totalorder %v117, 124
    %v1117 = vsel %vm1116, %v1113, %v1115
    %v1118 = vsel %vm1116, %v1115, %v1113
    %v1119 = vmax.f32 %v1110, %v1117
    %v1120 = vmax.f32 %v1111, %v1118
    %1121 = vrot.lane.b32.xlu0 %v758, 120
    %v1122 = vpop.permute.xlu0 %1121
    %1123 = vrot.lane.b32.xlu0 %v759, 120
    %v1124 = vpop.permute.xlu0 %1123
    %vm1125 = vcmp.lt.s32.totalorder %v117, 120
    %v1126 = vsel %vm1125, %v1122, %v1124
    %v1127 = vsel %vm1125, %v1124, %v1122
    %v1128 = vmax.f32 %v1119, %v1126
    %v1129 = vmax.f32 %v1120, %v1127
    %1130 = vrot.lane.b32.xlu0 %v1128, 4
    %v1131 = vpop.permute.xlu0 %1130
    %1132 = vrot.lane.b32.xlu0 %v1129, 4
    %v1133 = vpop.permute.xlu0 %1132
    %vm1134 = vcmp.lt.s32.totalorder %v117, 4
    %v1135 = vsel %vm1134, %v1131, %v1133
    %v1136 = vsel %vm1134, %v1133, %v1131
    %v1137 = vsel %vm127, %v1136, 0.0
    %v1138 = vsel %vm128, %v1135, 0.0
    %1139 = vrot.lane.b32.xlu0 %v1137, 127
    %v1140 = vpop.permute.xlu0 %1139
    %1141 = vrot.lane.b32.xlu0 %v1138, 127
    %v1142 = vpop.permute.xlu0 %1141
    %v1143 = vsel %vm764, %v1140, %v1142
    %v1144 = vsel %vm764, %v1142, %v1140
    %v1145 = vadd.f32 %v1137, %v1143
    %v1146 = vadd.f32 %v1138, %v1144
    %1147 = vrot.lane.b32.xlu0 %v1145, 126
    %v1148 = vpop.permute.xlu0 %1147
    %1149 = vrot.lane.b32.xlu0 %v1146, 126
    %v1150 = vpop.permute.xlu0 %1149
    %v1151 = vsel %vm773, %v1148, %v1150
    %v1152 = vsel %vm773, %v1150, %v1148
    %v1153 = vadd.f32 %v1145, %v1151
    %v1154 = vadd.f32 %v1146, %v1152
    %1155 = vrot.lane.b32.xlu0 %v1153, 124
    %v1156 = vpop.permute.xlu0 %1155
    %1157 = vrot.lane.b32.xlu0 %v1154, 124
    %v1158 = vpop.permute.xlu0 %1157
    %v1159 = vsel %vm1116, %v1156, %v1158
    %v1160 = vsel %vm1116, %v1158, %v1156
    %v1161 = vadd.f32 %v1153, %v1159
    %v1162 = vadd.f32 %v1154, %v1160
    %1163 = vrot.lane.b32.xlu0 %v1137, 120
    %v1164 = vpop.permute.xlu0 %1163
    %1165 = vrot.lane.b32.xlu0 %v1138, 120
    %v1166 = vpop.permute.xlu0 %1165
    %v1167 = vsel %vm1125, %v1164, %v1166
    %v1168 = vsel %vm1125, %v1166, %v1164
    %v1169 = vadd.f32 %v1161, %v1167
    %v1170 = vadd.f32 %v1162, %v1168
    %1171 = vrot.lane.b32.xlu0 %v1169, 4
    %v1172 = vpop.permute.xlu0 %1171
    %1173 = vrot.lane.b32.xlu0 %v1170, 4
    %v1174 = vpop.permute.xlu0 %1173
    %v1175 = vsel %vm1134, %v1172, %v1174
    %v1176 = vsel %vm1134, %v1174, %v1172
    %v1177 = vmul.f32 %v1176, 0.11111111
    %v1178 = vmul.f32 %v1175, 0.11111111
    %v1179 = vsel %vm127, %v1177, 0.0
    %v1180 = vsel %vm128, %v1178, 0.0
    %s1181 = sld [smem:[#allocation13]]
    %v1182 = vstv %s1181
    %s1183 = sld [smem:[#allocation13 + $0x1]]
    %v1184 = vstv %s1183
    %s1185 = sld [smem:[#allocation13 + $0x2]]
    %v1186 = vstv %s1185
    %1187 = vrot.lane.b32.xlu0 %v1179, 91
    %v1188 = vpop.permute.xlu0 %1187
    %1189 = vrot.lane.b32.xlu0 %v1180, 91
    %v1190 = vpop.permute.xlu0 %1189
    %vm1191 = vcmp.lt.s32.totalorder %v117, 91
    %v1192 = vsel %vm1191, %v1188, %v1190
    %s1193 = sld [smem:[#allocation9]]
    %v1194 = vstv %s1193
    %v1195 = vmul.f32 %v1192, %v1194
    %v1196 = vadd.f32 %v1182, %v1195
    %s1197 = sld [smem:[#allocation9 + $0x7]]
    %v1198 = vstv %s1197
    %v1199 = vmul.f32 %v1192, %v1198
    %v1200 = vadd.f32 %v1184, %v1199
    %s1201 = sld [smem:[#allocation9 + $0xe]]
    %v1202 = vstv %s1201
    %v1203 = vmul.f32 %v1192, %v1202
    %v1204 = vadd.f32 %v1186, %v1203
    %1205 = vrot.lane.b32.xlu0 %v1179, 82
    %v1206 = vpop.permute.xlu0 %1205
    %1207 = vrot.lane.b32.xlu0 %v1180, 82
    %v1208 = vpop.permute.xlu0 %1207
    %vm1209 = vcmp.lt.s32.totalorder %v117, 82
    %v1210 = vsel %vm1209, %v1206, %v1208
    %s1211 = sld [smem:[#allocation9 + $0x1]]
    %v1212 = vstv %s1211
    %v1213 = vmul.f32 %v1210, %v1212
    %v1214 = vadd.f32 %v1196, %v1213
    %s1215 = sld [smem:[#allocation9 + $0x8]]
    %v1216 = vstv %s1215
    %v1217 = vmul.f32 %v1210, %v1216
    %v1218 = vadd.f32 %v1200, %v1217
    %s1219 = sld [smem:[#allocation9 + $0xf]]
    %v1220 = vstv %s1219
    %v1221 = vmul.f32 %v1210, %v1220
    %v1222 = vadd.f32 %v1204, %v1221
    %1223 = vrot.lane.b32.xlu0 %v1179, 73
    %v1224 = vpop.permute.xlu0 %1223
    %1225 = vrot.lane.b32.xlu0 %v1180, 73
    %v1226 = vpop.permute.xlu0 %1225
    %v1227 = vsel %vm825, %v1224, %v1226
    %s1228 = sld [smem:[#allocation9 + $0x2]]
    %v1229 = vstv %s1228
    %v1230 = vmul.f32 %v1227, %v1229
    %v1231 = vadd.f32 %v1214, %v1230
    %s1232 = sld [smem:[#allocation9 + $0x9]]
    %v1233 = vstv %s1232
    %v1234 = vmul.f32 %v1227, %v1233
    %v1235 = vadd.f32 %v1218, %v1234
    %s1236 = sld [smem:[#allocation9 + $0x10]]
    %v1237 = vstv %s1236
    %v1238 = vmul.f32 %v1227, %v1237
    %v1239 = vadd.f32 %v1222, %v1238
    %1240 = vrot.lane.b32.xlu0 %v1179, 64
    %v1241 = vpop.permute.xlu0 %1240
    %1242 = vrot.lane.b32.xlu0 %v1180, 64
    %v1243 = vpop.permute.xlu0 %1242
    %v1244 = vsel %vm288, %v1241, %v1243
    %s1245 = sld [smem:[#allocation9 + $0x3]]
    %v1246 = vstv %s1245
    %v1247 = vmul.f32 %v1244, %v1246
    %v1248 = vadd.f32 %v1231, %v1247
    %s1249 = sld [smem:[#allocation9 + $0xa]]
    %v1250 = vstv %s1249
    %v1251 = vmul.f32 %v1244, %v1250
    %v1252 = vadd.f32 %v1235, %v1251
    %s1253 = sld [smem:[#allocation9 + $0x11]]
    %v1254 = vstv %s1253
    %v1255 = vmul.f32 %v1244, %v1254
    %v1256 = vadd.f32 %v1239, %v1255
    %1257 = vrot.lane.b32.xlu0 %v1179, 55
    %v1258 = vpop.permute.xlu0 %1257
    %1259 = vrot.lane.b32.xlu0 %v1180, 55
    %v1260 = vpop.permute.xlu0 %1259
    %v1261 = vsel %vm954, %v1258, %v1260
    %s1262 = sld [smem:[#allocation9 + $0x4]]
    %v1263 = vstv %s1262
    %v1264 = vmul.f32 %v1261, %v1263
    %v1265 = vadd.f32 %v1248, %v1264
    %s1266 = sld [smem:[#allocation9 + $0xb]]
    %v1267 = vstv %s1266
    %v1268 = vmul.f32 %v1261, %v1267
    %v1269 = vadd.f32 %v1252, %v1268
    %s1270 = sld [smem:[#allocation9 + $0x12]]
    %v1271 = vstv %s1270
    %v1272 = vmul.f32 %v1261, %v1271
    %v1273 = vadd.f32 %v1256, %v1272
    %1274 = vrot.lane.b32.xlu0 %v1179, 46
    %v1275 = vpop.permute.xlu0 %1274
    %1276 = vrot.lane.b32.xlu0 %v1180, 46
    %v1277 = vpop.permute.xlu0 %1276
    %vm1278 = vcmp.lt.s32.totalorder %v117, 46
    %v1279 = vsel %vm1278, %v1275, %v1277
    %s1280 = sld [smem:[#allocation9 + $0x5]]
    %v1281 = vstv %s1280
    %v1282 = vmul.f32 %v1279, %v1281
    %v1283 = vadd.f32 %v1265, %v1282
    %s1284 = sld [smem:[#allocation9 + $0xc]]
    %v1285 = vstv %s1284
    %v1286 = vmul.f32 %v1279, %v1285
    %v1287 = vadd.f32 %v1269, %v1286
    %s1288 = sld [smem:[#allocation9 + $0x13]]
    %v1289 = vstv %s1288
    %v1290 = vmul.f32 %v1279, %v1289
    %v1291 = vadd.f32 %v1273, %v1290
    %1292 = vrot.lane.b32.xlu0 %v1179, 37
    %v1293 = vpop.permute.xlu0 %1292
    %1294 = vrot.lane.b32.xlu0 %v1180, 37
    %v1295 = vpop.permute.xlu0 %1294
    %vm1296 = vcmp.lt.s32.totalorder %v117, 37
    %v1297 = vsel %vm1296, %v1293, %v1295
    %s1298 = sld [smem:[#allocation9 + $0x6]]
    %v1299 = vstv %s1298
    %v1300 = vmul.f32 %v1297, %v1299
    %v1301 = vadd.f32 %v1283, %v1300
    %s1302 = sld [smem:[#allocation9 + $0xd]]
    %v1303 = vstv %s1302
    %v1304 = vmul.f32 %v1297, %v1303
    %v1305 = vadd.f32 %v1287, %v1304
    %s1306 = sld [smem:[#allocation9 + $0x14]]
    %v1307 = vstv %s1306
    %v1308 = vmul.f32 %v1297, %v1307
    %v1309 = vadd.f32 %v1291, %v1308
    %v1312 = vunpack.c.l.s4 1966171168
    %v1313 = vunpack.c.0.s8 %v1312
    %v1314 = vlaneseq
    %v1315 = vshrl.u32 %v1314, 7
    %v1316 = vsub.s32 %v1313, %v1315
    %v1317 = vrot.slane %v1301, %v1316
    %v1318 = vcombine.high %v1317, %v1317
    %v1320 = vunpack.c.l.s4 1966171168
    %v1321 = vunpack.c.0.s8 %v1320
    %v1322 = vlaneseq
    %v1323 = vshrl.u32 %v1322, 7
    %v1324 = vsub.s32 %v1321, %v1323
    %v1325 = vrot.slane %v1317, %v1324
    %v1327 = vunpack.c.l.s4 1966171168
    %v1328 = vunpack.c.0.s8 %v1327
    %v1329 = vlaneseq
    %v1330 = vshrl.u32 %v1329, 7
    %v1331 = vsub.s32 %v1328, %v1330
    %v1332 = vrot.slane %v1318, %v1331
    %v1337 = vunpack.c.l.s4 1966171168
    %v1338 = vunpack.c.0.s8 %v1337
    %v1339 = vlaneseq
    %v1340 = vshrl.u32 %v1339, 7
    %v1341 = vsub.s32 %v1338, %v1340
    %v1342 = vrot.slane %v1305, %v1341
    %v1343 = vcombine.high %v1342, %v1342
    %v1345 = vunpack.c.l.s4 1966171168
    %v1346 = vunpack.c.0.s8 %v1345
    %v1347 = vlaneseq
    %v1348 = vshrl.u32 %v1347, 7
    %v1349 = vsub.s32 %v1346, %v1348
    %v1350 = vrot.slane %v1342, %v1349
    %v1352 = vunpack.c.l.s4 1966171168
    %v1353 = vunpack.c.0.s8 %v1352
    %v1354 = vlaneseq
    %v1355 = vshrl.u32 %v1354, 7
    %v1356 = vsub.s32 %v1353, %v1355
    %v1357 = vrot.slane %v1343, %v1356
    %v1360 = vunpack.c.l.s4 1966171168
    %v1361 = vunpack.c.0.s8 %v1360
    %v1362 = vlaneseq
    %v1363 = vshrl.u32 %v1362, 7
    %v1364 = vsub.s32 %v1361, %v1363
    %v1365 = vrot.slane %v1309, %v1364
    %v1366 = vcombine.high %v1365, %v1365
    %v1368 = vunpack.c.l.s4 1966171168
    %v1369 = vunpack.c.0.s8 %v1368
    %v1370 = vlaneseq
    %v1371 = vshrl.u32 %v1370, 7
    %v1372 = vsub.s32 %v1369, %v1371
    %v1373 = vrot.slane %v1365, %v1372
    %v1375 = vunpack.c.l.s4 1966171168
    %v1376 = vunpack.c.0.s8 %v1375
    %v1377 = vlaneseq
    %v1378 = vshrl.u32 %v1377, 7
    %v1379 = vsub.s32 %v1376, %v1378
    %v1380 = vrot.slane %v1366, %v1379
    %v1381 = vlaneseq
    %v1382 = vshrl.u32 %v1381, 7
    %v1383 = vsub.s32 0, %v1382
    %v1384 = vrot.slane %v1350, %v1383
    %v1385 = vlaneseq
    %v1386 = vshrl.u32 %v1385, 7
    %v1387 = vsub.s32 0, %v1386
    %v1388 = vrot.slane %v1357, %v1387
    %v1391 = vlaneseq
    %v1392 = vshrl.u32 %v1391, 7
    %v1393 = vsub.s32 0, %v1392
    %v1394 = vrot.slane %v1373, %v1393
    %v1395 = vlaneseq
    %v1396 = vshrl.u32 %v1395, 7
    %v1397 = vsub.s32 0, %v1396
    %v1398 = vrot.slane %v1380, %v1397
    %v1401 = vsel %vm733, %v1325, %v1384
    %v1402 = vsel %vm733, %v1332, %v1388
    %v1403 = vsel %vm736, %v1401, %v1394
    %v1404 = vsel %vm736, %v1402, %v1398
    %1405 = vst [vmem:[#allocation15 + $0xd] sm:$0x7] %v1403
    %1406 = vst [vmem:[#allocation15 + $0x1d] sm:$0x7] %v1404
    // Predicated region
    $region58: #{tpu_custom_call.1} parent=1 // pred_check
      _
    $region59: #{tpu_custom_call.1} parent=1 // pred_check_branch
      %1408 = sbr.rel (0) target = $region61
    $region60: #{tpu_custom_call.1} parent=1 // pred_region
      %s1410 = ssub.s32 512, 512
      %1411 = vsyncadd [#allocation4], %s1410
      %s1412 = sshll.u32 [#allocation15], 4
      %s1413 = int_to_ptr.vmem [resolvable:$true] %s1412
      %1418 = dma.vmem_to_hbm [thread:$0]  %s1413, 512, %s7, [#allocation4], 128, 128, 8
    $region61: #{tpu_custom_call.1} parent=1 // pred_fallthru
      _
    // Predicated region
    $region62: #{tpu_custom_call.1} parent=1 // pred_check
      _
    $region63: #{tpu_custom_call.1} parent=1 // pred_check_branch
      %1420 = sbr.rel (0) target = $region65
    $region64: #{tpu_custom_call.1} parent=1 // pred_region
      %1421 = dma.done [#allocation4], 512
    $region65: #{tpu_custom_call.1} parent=1 // pred_fallthru
      _
    %1422 = vsyncpa [#allocation3], 1
    %1423 = vsyncpa [#allocation4], 1
    %1424 = vsyncpa [#allocation5], 1
    %1425 = vsyncpa [#allocation8], 1
    %1426 = vsyncpa [#allocation11], 1
    %1427 = vsyncpa [#allocation14], 1

</llo_original>
